<compile_context>
chip_gen: v6e
topology: v6e:2x2x1
jax: 0.10.0
libtpu: 0.0.40
codegen_flags: <defaults>
</compile_context>

<pallas_src>
import jax
import jax.numpy as jnp
import numpy as np
from jax.experimental import pallas as pl
from jax.experimental.pallas import tpu as pltpu

K = 5            # 5x5 kernel
PAD = 2          # 'same' padding for stride 1
NUM_LAYERS = 4   # s0.conv1, s0.conv2, s1.conv1, s1.conv2
LANES = 128      # vreg lane width


def _fused_model_kernel(slab_ref, cmask_ref, imask_ref, wflat_ref, b_ref, out_ref):
    """slab_ref: (Hs, 128) f32 VMEM -- zero-padded packed planes; plane k sits in
       lanes [k*SEG+PAD, k*SEG+PAD+W), rows [PAD, PAD+H); zeros elsewhere.
    cmask_ref: (1, 128) f32 VMEM -- 1.0 on x-chain lanes, 0.0 on weight-chain lanes.
    imask_ref: (1, 128) f32 VMEM -- 1.0 on valid interior lanes, 0.0 on gaps/dead lanes.
    wflat_ref: (4*K*K,) f32 SMEM -- the 4 conv filters, row-major, ordered
               [s0.conv1, s0.conv2, s1.conv1, s1.conv2].
    b_ref: (4,) f32 SMEM biases (same order).
    out_ref: (H, 128) f32 VMEM -- packed result slab (interior lanes valid)."""
    H, L = out_ref.shape
    cm = cmask_ref[...]          # (1, L)
    icm = 1.0 - cm               # hoisted once
    im = imask_ref[...]          # (1, L)

    def conv_pass(P, sub):
        # P: (>= H+2*PAD, L) padded value slab with zero borders / gap lanes.
        acc = jnp.zeros((H, L), jnp.float32)
        for dh in range(K):
            band = P[dh:dh + H, :]                       # dh row-band, loaded once
            for dw in range(K):
                t = dh * K + dw
                s1 = wflat_ref[(2 * sub + 0) * K * K + t]   # conv1 tap (x chain)
                s2 = wflat_ref[(2 * sub + 1) * K * K + t]   # conv2 tap (weight chain)
                tap = cm * s1 + icm * s2                    # per-lane tap vector
                sh = (PAD - dw) % L
                shifted = band if sh == 0 else pltpu.roll(band, sh, axis=1)
                acc = acc + shifted * tap
        bias = cm * b_ref[2 * sub + 0] + icm * b_ref[2 * sub + 1]
        # Zero the gap/dead lanes so the next chained conv sees fresh zero padding.
        return (acc + bias) * im

    # ModelSub #0 (both chains in one pass), then ModelSub #1.
    y0 = conv_pass(slab_ref[...], 0)
    zrow = jnp.zeros((PAD, L), jnp.float32)
    y1 = conv_pass(jnp.concatenate([zrow, y0, zrow], axis=0), 1)
    out_ref[...] = y1


def model_forward(x, weight, params):
    """x, weight: (N, 1, H, W) f32.  params: 4 tuples of ((1,1,5,5) w, (1,) b)
    ordered [s0.conv1, s0.conv2, s1.conv1, s1.conv2].
    Returns (x_out, weight_out), both (N, 1, H, W) f32 -- same semantics as the
    PyTorch Model.forward."""
    N, C, H, W = x.shape
    assert C == 1 and weight.shape == x.shape

    SEG = W + 2 * PAD                 # lane segment per plane (16 + 4 = 20)
    n_planes = 2 * N                  # x planes then weight planes
    assert n_planes * SEG <= LANES, "packed-lane layout needs 2*N*(W+4) <= 128"
    Hs = ((H + 2 * PAD + 7) // 8) * 8  # row-padded slab height (24 for H=16)

    x2 = x.reshape(N, H, W).astype(jnp.float32)
    w2 = weight.reshape(N, H, W).astype(jnp.float32)

    # Build the lane-dense packed, zero-padded slab (Hs, 128) in the wrapper
    # (pure layout plumbing; one dense DMA into the kernel).
    planes = jnp.concatenate([x2, w2], axis=0)                       # (2N, H, W)
    planes = jnp.pad(planes, ((0, 0), (0, 0), (PAD, PAD)))           # (2N, H, SEG)
    rows = jnp.transpose(planes, (1, 0, 2)).reshape(H, n_planes * SEG)
    slab = jnp.pad(rows, ((PAD, Hs - H - PAD), (0, LANES - n_planes * SEG)))

    # Per-lane masks (precomputed host-side; tiny).
    lane = np.arange(LANES)
    plane_id = lane // SEG
    in_seg = lane % SEG
    interior = (plane_id < n_planes) & (in_seg >= PAD) & (in_seg < PAD + W)
    cmask = jnp.asarray((plane_id < N).astype(np.float32).reshape(1, LANES))
    imask = jnp.asarray(interior.astype(np.float32).reshape(1, LANES))

    w_flat = jnp.concatenate([w.reshape(-1) for (w, _) in params]).astype(jnp.float32)
    b_flat = jnp.concatenate([b.reshape(-1) for (_, b) in params]).astype(jnp.float32)

    out_slab = pl.pallas_call(
        _fused_model_kernel,
        out_shape=jax.ShapeDtypeStruct((H, LANES), jnp.float32),
        # Single invocation (no grid): whole problem is a handful of vregs, so
        # any grid/TC-sharding would only add per-step pipeline overhead.
        in_specs=[
            pl.BlockSpec(memory_space=pltpu.MemorySpace.VMEM),   # packed slab
            pl.BlockSpec(memory_space=pltpu.MemorySpace.VMEM),   # chain mask
            pl.BlockSpec(memory_space=pltpu.MemorySpace.VMEM),   # interior mask
            pl.BlockSpec(memory_space=pltpu.MemorySpace.SMEM),   # filters (flat)
            pl.BlockSpec(memory_space=pltpu.MemorySpace.SMEM),   # biases
        ],
        out_specs=pl.BlockSpec(memory_space=pltpu.MemorySpace.VMEM),
    )(slab, cmask, imask, w_flat, b_flat)

    # Unpack the lane-dense slab back to (N, 1, H, W) per chain (layout plumbing).
    res = out_slab[:, :n_planes * SEG].reshape(H, n_planes, SEG)[:, :, PAD:PAD + W]
    res = jnp.transpose(res, (1, 0, 2))                              # (2N, H, W)
    x_out = res[:N].reshape(N, 1, H, W)
    w_out = res[N:].reshape(N, 1, H, W)
    # TODO(synk): if N*H*W grows past the 128-lane packing budget, fall back to a
    # ("parallel",) grid over planes with 128-lane W tiling.
    return x_out, w_out


def init_params(key):
    """Deterministic params for the 4 conv layers, PyTorch default init:
    U(-1/sqrt(fan_in), 1/sqrt(fan_in)) with fan_in = 25."""
    params = []
    keys = jax.random.split(key, 2 * NUM_LAYERS)
    bound = 1.0 / (K * K) ** 0.5
    for i in range(NUM_LAYERS):
        w = jax.random.uniform(keys[2 * i], (1, 1, K, K), jnp.float32,
                               minval=-bound, maxval=bound)
        b = jax.random.uniform(keys[2 * i + 1], (1,), jnp.float32,
                               minval=-bound, maxval=bound)
        params.append((w, b))
    return params


def _ref_conv(x, w, b):
    """Pure-JAX reference: nn.Conv2d(1,1,5,stride=1,padding=2)."""
    y = jax.lax.conv_general_dilated(
        x, w, window_strides=(1, 1), padding=((PAD, PAD), (PAD, PAD)),
        dimension_numbers=("NCHW", "OIHW", "NCHW"),
        precision=jax.lax.Precision.HIGHEST)
    return y + b.reshape(1, 1, 1, 1)


def _ref_model(x, weight, params):
    (w0, b0), (w1, b1), (w2, b2), (w3, b3) = params
    x = _ref_conv(x, w0, b0)
    weight = _ref_conv(weight, w1, b1)
    x = _ref_conv(x, w2, b2)
    weight = _ref_conv(weight, w3, b3)
    return x, weight


if __name__ == "__main__":
    key = jax.random.PRNGKey(0)
    k_x, k_w, k_p = jax.random.split(key, 3)

    N, C, H, W = 2, 1, 16, 16
    x = jax.random.normal(k_x, (N, C, H, W), jnp.float32)
    weight = jax.random.normal(k_w, (N, C, H, W), jnp.float32)
    params = init_params(k_p)

    out_x, out_w = model_forward(x, weight, params)
    jax.block_until_ready((out_x, out_w))

    assert out_x.shape == (N, C, H, W) and out_w.shape == (N, C, H, W)

    ref_x, ref_w = _ref_model(x, weight, params)
    assert jnp.allclose(out_x, ref_x, rtol=1e-4, atol=1e-4)
    assert jnp.allclose(out_w, ref_w, rtol=1e-4, atol=1e-4)

    print("KERNEL_OK")
</pallas_src>

<mosaic_0001>
module attributes {stable_mosaic.version = 11 : i64} {
  func.func @_fused_model_kernel(%arg0: memref<24x128xf32, #tpu.memory_space<vmem>>, %arg1: memref<1x128xf32, #tpu.memory_space<vmem>>, %arg2: memref<1x128xf32, #tpu.memory_space<vmem>>, %arg3: memref<100xf32, #tpu.memory_space<smem>>, %arg4: memref<4xf32, #tpu.memory_space<smem>>, %arg5: memref<16x128xf32, #tpu.memory_space<vmem>>) attributes {dimension_semantics = [], scalar_prefetch = 0 : i64, scratch_operands = 0 : i64, tpu.core_type = #tpu.core_type<tc>} {
    %c0 = arith.constant 0 : index
    %c0_0 = arith.constant 0 : index
    %0 = vector.load %arg1[%c0, %c0_0] : memref<1x128xf32, #tpu.memory_space<vmem>>, vector<1x128xf32>
    %cst = arith.constant 1.000000e+00 : f32
    %1 = vector.broadcast %cst : f32 to vector<1x128xf32>
    %2 = arith.subf %1, %0 : vector<1x128xf32>
    %c0_1 = arith.constant 0 : index
    %c0_2 = arith.constant 0 : index
    %3 = vector.load %arg2[%c0_1, %c0_2] : memref<1x128xf32, #tpu.memory_space<vmem>>, vector<1x128xf32>
    %c0_3 = arith.constant 0 : index
    %c0_4 = arith.constant 0 : index
    %4 = vector.load %arg0[%c0_3, %c0_4] : memref<24x128xf32, #tpu.memory_space<vmem>>, vector<24x128xf32>
    %cst_5 = arith.constant 0.000000e+00 : f32
    %5 = vector.broadcast %cst_5 : f32 to vector<16x128xf32>
    %6 = vector.extract_strided_slice %4 {offsets = [0, 0], sizes = [16, 128], strides = [1, 1]} : vector<24x128xf32> to vector<16x128xf32>
    %c0_6 = arith.constant 0 : index
    %7 = memref.load %arg3[%c0_6] : memref<100xf32, #tpu.memory_space<smem>>
    %c25 = arith.constant 25 : index
    %8 = memref.load %arg3[%c25] : memref<100xf32, #tpu.memory_space<smem>>
    %9 = vector.broadcast %7 : f32 to vector<1x128xf32>
    %10 = arith.mulf %0, %9 : vector<1x128xf32>
    %11 = vector.broadcast %8 : f32 to vector<1x128xf32>
    %12 = arith.mulf %2, %11 : vector<1x128xf32>
    %13 = arith.addf %10, %12 : vector<1x128xf32>
    %c2_i32 = arith.constant 2 : i32
    %14 = tpu.dynamic_rotate %6 by %c2_i32 dim 1 : vector<16x128xf32>, i32 -> vector<16x128xf32>
    %15 = vector.broadcast %13 : vector<1x128xf32> to vector<16x128xf32>
    %16 = arith.mulf %14, %15 : vector<16x128xf32>
    %17 = arith.addf %5, %16 : vector<16x128xf32>
    %c1 = arith.constant 1 : index
    %18 = memref.load %arg3[%c1] : memref<100xf32, #tpu.memory_space<smem>>
    %c26 = arith.constant 26 : index
    %19 = memref.load %arg3[%c26] : memref<100xf32, #tpu.memory_space<smem>>
    %20 = vector.broadcast %18 : f32 to vector<1x128xf32>
    %21 = arith.mulf %0, %20 : vector<1x128xf32>
    %22 = vector.broadcast %19 : f32 to vector<1x128xf32>
    %23 = arith.mulf %2, %22 : vector<1x128xf32>
    %24 = arith.addf %21, %23 : vector<1x128xf32>
    %c1_i32 = arith.constant 1 : i32
    %25 = tpu.dynamic_rotate %6 by %c1_i32 dim 1 : vector<16x128xf32>, i32 -> vector<16x128xf32>
    %26 = vector.broadcast %24 : vector<1x128xf32> to vector<16x128xf32>
    %27 = arith.mulf %25, %26 : vector<16x128xf32>
    %28 = arith.addf %17, %27 : vector<16x128xf32>
    %c2 = arith.constant 2 : index
    %29 = memref.load %arg3[%c2] : memref<100xf32, #tpu.memory_space<smem>>
    %c27 = arith.constant 27 : index
    %30 = memref.load %arg3[%c27] : memref<100xf32, #tpu.memory_space<smem>>
    %31 = vector.broadcast %29 : f32 to vector<1x128xf32>
    %32 = arith.mulf %0, %31 : vector<1x128xf32>
    %33 = vector.broadcast %30 : f32 to vector<1x128xf32>
    %34 = arith.mulf %2, %33 : vector<1x128xf32>
    %35 = arith.addf %32, %34 : vector<1x128xf32>
    %36 = vector.broadcast %35 : vector<1x128xf32> to vector<16x128xf32>
    %37 = arith.mulf %6, %36 : vector<16x128xf32>
    %38 = arith.addf %28, %37 : vector<16x128xf32>
    %c3 = arith.constant 3 : index
    %39 = memref.load %arg3[%c3] : memref<100xf32, #tpu.memory_space<smem>>
    %c28 = arith.constant 28 : index
    %40 = memref.load %arg3[%c28] : memref<100xf32, #tpu.memory_space<smem>>
    %41 = vector.broadcast %39 : f32 to vector<1x128xf32>
    %42 = arith.mulf %0, %41 : vector<1x128xf32>
    %43 = vector.broadcast %40 : f32 to vector<1x128xf32>
    %44 = arith.mulf %2, %43 : vector<1x128xf32>
    %45 = arith.addf %42, %44 : vector<1x128xf32>
    %c127_i32 = arith.constant 127 : i32
    %46 = tpu.dynamic_rotate %6 by %c127_i32 dim 1 : vector<16x128xf32>, i32 -> vector<16x128xf32>
    %47 = vector.broadcast %45 : vector<1x128xf32> to vector<16x128xf32>
    %48 = arith.mulf %46, %47 : vector<16x128xf32>
    %49 = arith.addf %38, %48 : vector<16x128xf32>
    %c4 = arith.constant 4 : index
    %50 = memref.load %arg3[%c4] : memref<100xf32, #tpu.memory_space<smem>>
    %c29 = arith.constant 29 : index
    %51 = memref.load %arg3[%c29] : memref<100xf32, #tpu.memory_space<smem>>
    %52 = vector.broadcast %50 : f32 to vector<1x128xf32>
    %53 = arith.mulf %0, %52 : vector<1x128xf32>
    %54 = vector.broadcast %51 : f32 to vector<1x128xf32>
    %55 = arith.mulf %2, %54 : vector<1x128xf32>
    %56 = arith.addf %53, %55 : vector<1x128xf32>
    %c126_i32 = arith.constant 126 : i32
    %57 = tpu.dynamic_rotate %6 by %c126_i32 dim 1 : vector<16x128xf32>, i32 -> vector<16x128xf32>
    %58 = vector.broadcast %56 : vector<1x128xf32> to vector<16x128xf32>
    %59 = arith.mulf %57, %58 : vector<16x128xf32>
    %60 = arith.addf %49, %59 : vector<16x128xf32>
    %61 = vector.extract_strided_slice %4 {offsets = [1, 0], sizes = [16, 128], strides = [1, 1]} : vector<24x128xf32> to vector<16x128xf32>
    %c5 = arith.constant 5 : index
    %62 = memref.load %arg3[%c5] : memref<100xf32, #tpu.memory_space<smem>>
    %c30 = arith.constant 30 : index
    %63 = memref.load %arg3[%c30] : memref<100xf32, #tpu.memory_space<smem>>
    %64 = vector.broadcast %62 : f32 to vector<1x128xf32>
    %65 = arith.mulf %0, %64 : vector<1x128xf32>
    %66 = vector.broadcast %63 : f32 to vector<1x128xf32>
    %67 = arith.mulf %2, %66 : vector<1x128xf32>
    %68 = arith.addf %65, %67 : vector<1x128xf32>
    %c2_i32_7 = arith.constant 2 : i32
    %69 = tpu.dynamic_rotate %61 by %c2_i32_7 dim 1 : vector<16x128xf32>, i32 -> vector<16x128xf32>
    %70 = vector.broadcast %68 : vector<1x128xf32> to vector<16x128xf32>
    %71 = arith.mulf %69, %70 : vector<16x128xf32>
    %72 = arith.addf %60, %71 : vector<16x128xf32>
    %c6 = arith.constant 6 : index
    %73 = memref.load %arg3[%c6] : memref<100xf32, #tpu.memory_space<smem>>
    %c31 = arith.constant 31 : index
    %74 = memref.load %arg3[%c31] : memref<100xf32, #tpu.memory_space<smem>>
    %75 = vector.broadcast %73 : f32 to vector<1x128xf32>
    %76 = arith.mulf %0, %75 : vector<1x128xf32>
    %77 = vector.broadcast %74 : f32 to vector<1x128xf32>
    %78 = arith.mulf %2, %77 : vector<1x128xf32>
    %79 = arith.addf %76, %78 : vector<1x128xf32>
    %c1_i32_8 = arith.constant 1 : i32
    %80 = tpu.dynamic_rotate %61 by %c1_i32_8 dim 1 : vector<16x128xf32>, i32 -> vector<16x128xf32>
    %81 = vector.broadcast %79 : vector<1x128xf32> to vector<16x128xf32>
    %82 = arith.mulf %80, %81 : vector<16x128xf32>
    %83 = arith.addf %72, %82 : vector<16x128xf32>
    %c7 = arith.constant 7 : index
    %84 = memref.load %arg3[%c7] : memref<100xf32, #tpu.memory_space<smem>>
    %c32 = arith.constant 32 : index
    %85 = memref.load %arg3[%c32] : memref<100xf32, #tpu.memory_space<smem>>
    %86 = vector.broadcast %84 : f32 to vector<1x128xf32>
    %87 = arith.mulf %0, %86 : vector<1x128xf32>
    %88 = vector.broadcast %85 : f32 to vector<1x128xf32>
    %89 = arith.mulf %2, %88 : vector<1x128xf32>
    %90 = arith.addf %87, %89 : vector<1x128xf32>
    %91 = vector.broadcast %90 : vector<1x128xf32> to vector<16x128xf32>
    %92 = arith.mulf %61, %91 : vector<16x128xf32>
    %93 = arith.addf %83, %92 : vector<16x128xf32>
    %c8 = arith.constant 8 : index
    %94 = memref.load %arg3[%c8] : memref<100xf32, #tpu.memory_space<smem>>
    %c33 = arith.constant 33 : index
    %95 = memref.load %arg3[%c33] : memref<100xf32, #tpu.memory_space<smem>>
    %96 = vector.broadcast %94 : f32 to vector<1x128xf32>
    %97 = arith.mulf %0, %96 : vector<1x128xf32>
    %98 = vector.broadcast %95 : f32 to vector<1x128xf32>
    %99 = arith.mulf %2, %98 : vector<1x128xf32>
    %100 = arith.addf %97, %99 : vector<1x128xf32>
    %c127_i32_9 = arith.constant 127 : i32
    %101 = tpu.dynamic_rotate %61 by %c127_i32_9 dim 1 : vector<16x128xf32>, i32 -> vector<16x128xf32>
    %102 = vector.broadcast %100 : vector<1x128xf32> to vector<16x128xf32>
    %103 = arith.mulf %101, %102 : vector<16x128xf32>
    %104 = arith.addf %93, %103 : vector<16x128xf32>
    %c9 = arith.constant 9 : index
    %105 = memref.load %arg3[%c9] : memref<100xf32, #tpu.memory_space<smem>>
    %c34 = arith.constant 34 : index
    %106 = memref.load %arg3[%c34] : memref<100xf32, #tpu.memory_space<smem>>
    %107 = vector.broadcast %105 : f32 to vector<1x128xf32>
    %108 = arith.mulf %0, %107 : vector<1x128xf32>
    %109 = vector.broadcast %106 : f32 to vector<1x128xf32>
    %110 = arith.mulf %2, %109 : vector<1x128xf32>
    %111 = arith.addf %108, %110 : vector<1x128xf32>
    %c126_i32_10 = arith.constant 126 : i32
    %112 = tpu.dynamic_rotate %61 by %c126_i32_10 dim 1 : vector<16x128xf32>, i32 -> vector<16x128xf32>
    %113 = vector.broadcast %111 : vector<1x128xf32> to vector<16x128xf32>
    %114 = arith.mulf %112, %113 : vector<16x128xf32>
    %115 = arith.addf %104, %114 : vector<16x128xf32>
    %116 = vector.extract_strided_slice %4 {offsets = [2, 0], sizes = [16, 128], strides = [1, 1]} : vector<24x128xf32> to vector<16x128xf32>
    %c10 = arith.constant 10 : index
    %117 = memref.load %arg3[%c10] : memref<100xf32, #tpu.memory_space<smem>>
    %c35 = arith.constant 35 : index
    %118 = memref.load %arg3[%c35] : memref<100xf32, #tpu.memory_space<smem>>
    %119 = vector.broadcast %117 : f32 to vector<1x128xf32>
    %120 = arith.mulf %0, %119 : vector<1x128xf32>
    %121 = vector.broadcast %118 : f32 to vector<1x128xf32>
    %122 = arith.mulf %2, %121 : vector<1x128xf32>
    %123 = arith.addf %120, %122 : vector<1x128xf32>
    %c2_i32_11 = arith.constant 2 : i32
    %124 = tpu.dynamic_rotate %116 by %c2_i32_11 dim 1 : vector<16x128xf32>, i32 -> vector<16x128xf32>
    %125 = vector.broadcast %123 : vector<1x128xf32> to vector<16x128xf32>
    %126 = arith.mulf %124, %125 : vector<16x128xf32>
    %127 = arith.addf %115, %126 : vector<16x128xf32>
    %c11 = arith.constant 11 : index
    %128 = memref.load %arg3[%c11] : memref<100xf32, #tpu.memory_space<smem>>
    %c36 = arith.constant 36 : index
    %129 = memref.load %arg3[%c36] : memref<100xf32, #tpu.memory_space<smem>>
    %130 = vector.broadcast %128 : f32 to vector<1x128xf32>
    %131 = arith.mulf %0, %130 : vector<1x128xf32>
    %132 = vector.broadcast %129 : f32 to vector<1x128xf32>
    %133 = arith.mulf %2, %132 : vector<1x128xf32>
    %134 = arith.addf %131, %133 : vector<1x128xf32>
    %c1_i32_12 = arith.constant 1 : i32
    %135 = tpu.dynamic_rotate %116 by %c1_i32_12 dim 1 : vector<16x128xf32>, i32 -> vector<16x128xf32>
    %136 = vector.broadcast %134 : vector<1x128xf32> to vector<16x128xf32>
    %137 = arith.mulf %135, %136 : vector<16x128xf32>
    %138 = arith.addf %127, %137 : vector<16x128xf32>
    %c12 = arith.constant 12 : index
    %139 = memref.load %arg3[%c12] : memref<100xf32, #tpu.memory_space<smem>>
    %c37 = arith.constant 37 : index
    %140 = memref.load %arg3[%c37] : memref<100xf32, #tpu.memory_space<smem>>
    %141 = vector.broadcast %139 : f32 to vector<1x128xf32>
    %142 = arith.mulf %0, %141 : vector<1x128xf32>
    %143 = vector.broadcast %140 : f32 to vector<1x128xf32>
    %144 = arith.mulf %2, %143 : vector<1x128xf32>
    %145 = arith.addf %142, %144 : vector<1x128xf32>
    %146 = vector.broadcast %145 : vector<1x128xf32> to vector<16x128xf32>
    %147 = arith.mulf %116, %146 : vector<16x128xf32>
    %148 = arith.addf %138, %147 : vector<16x128xf32>
    %c13 = arith.constant 13 : index
    %149 = memref.load %arg3[%c13] : memref<100xf32, #tpu.memory_space<smem>>
    %c38 = arith.constant 38 : index
    %150 = memref.load %arg3[%c38] : memref<100xf32, #tpu.memory_space<smem>>
    %151 = vector.broadcast %149 : f32 to vector<1x128xf32>
    %152 = arith.mulf %0, %151 : vector<1x128xf32>
    %153 = vector.broadcast %150 : f32 to vector<1x128xf32>
    %154 = arith.mulf %2, %153 : vector<1x128xf32>
    %155 = arith.addf %152, %154 : vector<1x128xf32>
    %c127_i32_13 = arith.constant 127 : i32
    %156 = tpu.dynamic_rotate %116 by %c127_i32_13 dim 1 : vector<16x128xf32>, i32 -> vector<16x128xf32>
    %157 = vector.broadcast %155 : vector<1x128xf32> to vector<16x128xf32>
    %158 = arith.mulf %156, %157 : vector<16x128xf32>
    %159 = arith.addf %148, %158 : vector<16x128xf32>
    %c14 = arith.constant 14 : index
    %160 = memref.load %arg3[%c14] : memref<100xf32, #tpu.memory_space<smem>>
    %c39 = arith.constant 39 : index
    %161 = memref.load %arg3[%c39] : memref<100xf32, #tpu.memory_space<smem>>
    %162 = vector.broadcast %160 : f32 to vector<1x128xf32>
    %163 = arith.mulf %0, %162 : vector<1x128xf32>
    %164 = vector.broadcast %161 : f32 to vector<1x128xf32>
    %165 = arith.mulf %2, %164 : vector<1x128xf32>
    %166 = arith.addf %163, %165 : vector<1x128xf32>
    %c126_i32_14 = arith.constant 126 : i32
    %167 = tpu.dynamic_rotate %116 by %c126_i32_14 dim 1 : vector<16x128xf32>, i32 -> vector<16x128xf32>
    %168 = vector.broadcast %166 : vector<1x128xf32> to vector<16x128xf32>
    %169 = arith.mulf %167, %168 : vector<16x128xf32>
    %170 = arith.addf %159, %169 : vector<16x128xf32>
    %171 = vector.extract_strided_slice %4 {offsets = [3, 0], sizes = [16, 128], strides = [1, 1]} : vector<24x128xf32> to vector<16x128xf32>
    %c15 = arith.constant 15 : index
    %172 = memref.load %arg3[%c15] : memref<100xf32, #tpu.memory_space<smem>>
    %c40 = arith.constant 40 : index
    %173 = memref.load %arg3[%c40] : memref<100xf32, #tpu.memory_space<smem>>
    %174 = vector.broadcast %172 : f32 to vector<1x128xf32>
    %175 = arith.mulf %0, %174 : vector<1x128xf32>
    %176 = vector.broadcast %173 : f32 to vector<1x128xf32>
    %177 = arith.mulf %2, %176 : vector<1x128xf32>
    %178 = arith.addf %175, %177 : vector<1x128xf32>
    %c2_i32_15 = arith.constant 2 : i32
    %179 = tpu.dynamic_rotate %171 by %c2_i32_15 dim 1 : vector<16x128xf32>, i32 -> vector<16x128xf32>
    %180 = vector.broadcast %178 : vector<1x128xf32> to vector<16x128xf32>
    %181 = arith.mulf %179, %180 : vector<16x128xf32>
    %182 = arith.addf %170, %181 : vector<16x128xf32>
    %c16 = arith.constant 16 : index
    %183 = memref.load %arg3[%c16] : memref<100xf32, #tpu.memory_space<smem>>
    %c41 = arith.constant 41 : index
    %184 = memref.load %arg3[%c41] : memref<100xf32, #tpu.memory_space<smem>>
    %185 = vector.broadcast %183 : f32 to vector<1x128xf32>
    %186 = arith.mulf %0, %185 : vector<1x128xf32>
    %187 = vector.broadcast %184 : f32 to vector<1x128xf32>
    %188 = arith.mulf %2, %187 : vector<1x128xf32>
    %189 = arith.addf %186, %188 : vector<1x128xf32>
    %c1_i32_16 = arith.constant 1 : i32
    %190 = tpu.dynamic_rotate %171 by %c1_i32_16 dim 1 : vector<16x128xf32>, i32 -> vector<16x128xf32>
    %191 = vector.broadcast %189 : vector<1x128xf32> to vector<16x128xf32>
    %192 = arith.mulf %190, %191 : vector<16x128xf32>
    %193 = arith.addf %182, %192 : vector<16x128xf32>
    %c17 = arith.constant 17 : index
    %194 = memref.load %arg3[%c17] : memref<100xf32, #tpu.memory_space<smem>>
    %c42 = arith.constant 42 : index
    %195 = memref.load %arg3[%c42] : memref<100xf32, #tpu.memory_space<smem>>
    %196 = vector.broadcast %194 : f32 to vector<1x128xf32>
    %197 = arith.mulf %0, %196 : vector<1x128xf32>
    %198 = vector.broadcast %195 : f32 to vector<1x128xf32>
    %199 = arith.mulf %2, %198 : vector<1x128xf32>
    %200 = arith.addf %197, %199 : vector<1x128xf32>
    %201 = vector.broadcast %200 : vector<1x128xf32> to vector<16x128xf32>
    %202 = arith.mulf %171, %201 : vector<16x128xf32>
    %203 = arith.addf %193, %202 : vector<16x128xf32>
    %c18 = arith.constant 18 : index
    %204 = memref.load %arg3[%c18] : memref<100xf32, #tpu.memory_space<smem>>
    %c43 = arith.constant 43 : index
    %205 = memref.load %arg3[%c43] : memref<100xf32, #tpu.memory_space<smem>>
    %206 = vector.broadcast %204 : f32 to vector<1x128xf32>
    %207 = arith.mulf %0, %206 : vector<1x128xf32>
    %208 = vector.broadcast %205 : f32 to vector<1x128xf32>
    %209 = arith.mulf %2, %208 : vector<1x128xf32>
    %210 = arith.addf %207, %209 : vector<1x128xf32>
    %c127_i32_17 = arith.constant 127 : i32
    %211 = tpu.dynamic_rotate %171 by %c127_i32_17 dim 1 : vector<16x128xf32>, i32 -> vector<16x128xf32>
    %212 = vector.broadcast %210 : vector<1x128xf32> to vector<16x128xf32>
    %213 = arith.mulf %211, %212 : vector<16x128xf32>
    %214 = arith.addf %203, %213 : vector<16x128xf32>
    %c19 = arith.constant 19 : index
    %215 = memref.load %arg3[%c19] : memref<100xf32, #tpu.memory_space<smem>>
    %c44 = arith.constant 44 : index
    %216 = memref.load %arg3[%c44] : memref<100xf32, #tpu.memory_space<smem>>
    %217 = vector.broadcast %215 : f32 to vector<1x128xf32>
    %218 = arith.mulf %0, %217 : vector<1x128xf32>
    %219 = vector.broadcast %216 : f32 to vector<1x128xf32>
    %220 = arith.mulf %2, %219 : vector<1x128xf32>
    %221 = arith.addf %218, %220 : vector<1x128xf32>
    %c126_i32_18 = arith.constant 126 : i32
    %222 = tpu.dynamic_rotate %171 by %c126_i32_18 dim 1 : vector<16x128xf32>, i32 -> vector<16x128xf32>
    %223 = vector.broadcast %221 : vector<1x128xf32> to vector<16x128xf32>
    %224 = arith.mulf %222, %223 : vector<16x128xf32>
    %225 = arith.addf %214, %224 : vector<16x128xf32>
    %226 = vector.extract_strided_slice %4 {offsets = [4, 0], sizes = [16, 128], strides = [1, 1]} : vector<24x128xf32> to vector<16x128xf32>
    %c20 = arith.constant 20 : index
    %227 = memref.load %arg3[%c20] : memref<100xf32, #tpu.memory_space<smem>>
    %c45 = arith.constant 45 : index
    %228 = memref.load %arg3[%c45] : memref<100xf32, #tpu.memory_space<smem>>
    %229 = vector.broadcast %227 : f32 to vector<1x128xf32>
    %230 = arith.mulf %0, %229 : vector<1x128xf32>
    %231 = vector.broadcast %228 : f32 to vector<1x128xf32>
    %232 = arith.mulf %2, %231 : vector<1x128xf32>
    %233 = arith.addf %230, %232 : vector<1x128xf32>
    %c2_i32_19 = arith.constant 2 : i32
    %234 = tpu.dynamic_rotate %226 by %c2_i32_19 dim 1 : vector<16x128xf32>, i32 -> vector<16x128xf32>
    %235 = vector.broadcast %233 : vector<1x128xf32> to vector<16x128xf32>
    %236 = arith.mulf %234, %235 : vector<16x128xf32>
    %237 = arith.addf %225, %236 : vector<16x128xf32>
    %c21 = arith.constant 21 : index
    %238 = memref.load %arg3[%c21] : memref<100xf32, #tpu.memory_space<smem>>
    %c46 = arith.constant 46 : index
    %239 = memref.load %arg3[%c46] : memref<100xf32, #tpu.memory_space<smem>>
    %240 = vector.broadcast %238 : f32 to vector<1x128xf32>
    %241 = arith.mulf %0, %240 : vector<1x128xf32>
    %242 = vector.broadcast %239 : f32 to vector<1x128xf32>
    %243 = arith.mulf %2, %242 : vector<1x128xf32>
    %244 = arith.addf %241, %243 : vector<1x128xf32>
    %c1_i32_20 = arith.constant 1 : i32
    %245 = tpu.dynamic_rotate %226 by %c1_i32_20 dim 1 : vector<16x128xf32>, i32 -> vector<16x128xf32>
    %246 = vector.broadcast %244 : vector<1x128xf32> to vector<16x128xf32>
    %247 = arith.mulf %245, %246 : vector<16x128xf32>
    %248 = arith.addf %237, %247 : vector<16x128xf32>
    %c22 = arith.constant 22 : index
    %249 = memref.load %arg3[%c22] : memref<100xf32, #tpu.memory_space<smem>>
    %c47 = arith.constant 47 : index
    %250 = memref.load %arg3[%c47] : memref<100xf32, #tpu.memory_space<smem>>
    %251 = vector.broadcast %249 : f32 to vector<1x128xf32>
    %252 = arith.mulf %0, %251 : vector<1x128xf32>
    %253 = vector.broadcast %250 : f32 to vector<1x128xf32>
    %254 = arith.mulf %2, %253 : vector<1x128xf32>
    %255 = arith.addf %252, %254 : vector<1x128xf32>
    %256 = vector.broadcast %255 : vector<1x128xf32> to vector<16x128xf32>
    %257 = arith.mulf %226, %256 : vector<16x128xf32>
    %258 = arith.addf %248, %257 : vector<16x128xf32>
    %c23 = arith.constant 23 : index
    %259 = memref.load %arg3[%c23] : memref<100xf32, #tpu.memory_space<smem>>
    %c48 = arith.constant 48 : index
    %260 = memref.load %arg3[%c48] : memref<100xf32, #tpu.memory_space<smem>>
    %261 = vector.broadcast %259 : f32 to vector<1x128xf32>
    %262 = arith.mulf %0, %261 : vector<1x128xf32>
    %263 = vector.broadcast %260 : f32 to vector<1x128xf32>
    %264 = arith.mulf %2, %263 : vector<1x128xf32>
    %265 = arith.addf %262, %264 : vector<1x128xf32>
    %c127_i32_21 = arith.constant 127 : i32
    %266 = tpu.dynamic_rotate %226 by %c127_i32_21 dim 1 : vector<16x128xf32>, i32 -> vector<16x128xf32>
    %267 = vector.broadcast %265 : vector<1x128xf32> to vector<16x128xf32>
    %268 = arith.mulf %266, %267 : vector<16x128xf32>
    %269 = arith.addf %258, %268 : vector<16x128xf32>
    %c24 = arith.constant 24 : index
    %270 = memref.load %arg3[%c24] : memref<100xf32, #tpu.memory_space<smem>>
    %c49 = arith.constant 49 : index
    %271 = memref.load %arg3[%c49] : memref<100xf32, #tpu.memory_space<smem>>
    %272 = vector.broadcast %270 : f32 to vector<1x128xf32>
    %273 = arith.mulf %0, %272 : vector<1x128xf32>
    %274 = vector.broadcast %271 : f32 to vector<1x128xf32>
    %275 = arith.mulf %2, %274 : vector<1x128xf32>
    %276 = arith.addf %273, %275 : vector<1x128xf32>
    %c126_i32_22 = arith.constant 126 : i32
    %277 = tpu.dynamic_rotate %226 by %c126_i32_22 dim 1 : vector<16x128xf32>, i32 -> vector<16x128xf32>
    %278 = vector.broadcast %276 : vector<1x128xf32> to vector<16x128xf32>
    %279 = arith.mulf %277, %278 : vector<16x128xf32>
    %280 = arith.addf %269, %279 : vector<16x128xf32>
    %c0_23 = arith.constant 0 : index
    %281 = memref.load %arg4[%c0_23] : memref<4xf32, #tpu.memory_space<smem>>
    %282 = vector.broadcast %281 : f32 to vector<1x128xf32>
    %283 = arith.mulf %0, %282 : vector<1x128xf32>
    %c1_24 = arith.constant 1 : index
    %284 = memref.load %arg4[%c1_24] : memref<4xf32, #tpu.memory_space<smem>>
    %285 = vector.broadcast %284 : f32 to vector<1x128xf32>
    %286 = arith.mulf %2, %285 : vector<1x128xf32>
    %287 = arith.addf %283, %286 : vector<1x128xf32>
    %288 = vector.broadcast %287 : vector<1x128xf32> to vector<16x128xf32>
    %289 = arith.addf %280, %288 : vector<16x128xf32>
    %290 = vector.broadcast %3 : vector<1x128xf32> to vector<16x128xf32>
    %291 = arith.mulf %289, %290 : vector<16x128xf32>
    %cst_25 = arith.constant 0.000000e+00 : f32
    %292 = vector.broadcast %cst_25 : f32 to vector<2x128xf32>
    %293 = tpu.concatenate %292, %291, %292 in 0 : vector<2x128xf32>, vector<16x128xf32>, vector<2x128xf32> -> vector<20x128xf32>
    %cst_26 = arith.constant 0.000000e+00 : f32
    %294 = vector.broadcast %cst_26 : f32 to vector<16x128xf32>
    %295 = vector.extract_strided_slice %293 {offsets = [0, 0], sizes = [16, 128], strides = [1, 1]} : vector<20x128xf32> to vector<16x128xf32>
    %c50 = arith.constant 50 : index
    %296 = memref.load %arg3[%c50] : memref<100xf32, #tpu.memory_space<smem>>
    %c75 = arith.constant 75 : index
    %297 = memref.load %arg3[%c75] : memref<100xf32, #tpu.memory_space<smem>>
    %298 = vector.broadcast %296 : f32 to vector<1x128xf32>
    %299 = arith.mulf %0, %298 : vector<1x128xf32>
    %300 = vector.broadcast %297 : f32 to vector<1x128xf32>
    %301 = arith.mulf %2, %300 : vector<1x128xf32>
    %302 = arith.addf %299, %301 : vector<1x128xf32>
    %c2_i32_27 = arith.constant 2 : i32
    %303 = tpu.dynamic_rotate %295 by %c2_i32_27 dim 1 : vector<16x128xf32>, i32 -> vector<16x128xf32>
    %304 = vector.broadcast %302 : vector<1x128xf32> to vector<16x128xf32>
    %305 = arith.mulf %303, %304 : vector<16x128xf32>
    %306 = arith.addf %294, %305 : vector<16x128xf32>
    %c51 = arith.constant 51 : index
    %307 = memref.load %arg3[%c51] : memref<100xf32, #tpu.memory_space<smem>>
    %c76 = arith.constant 76 : index
    %308 = memref.load %arg3[%c76] : memref<100xf32, #tpu.memory_space<smem>>
    %309 = vector.broadcast %307 : f32 to vector<1x128xf32>
    %310 = arith.mulf %0, %309 : vector<1x128xf32>
    %311 = vector.broadcast %308 : f32 to vector<1x128xf32>
    %312 = arith.mulf %2, %311 : vector<1x128xf32>
    %313 = arith.addf %310, %312 : vector<1x128xf32>
    %c1_i32_28 = arith.constant 1 : i32
    %314 = tpu.dynamic_rotate %295 by %c1_i32_28 dim 1 : vector<16x128xf32>, i32 -> vector<16x128xf32>
    %315 = vector.broadcast %313 : vector<1x128xf32> to vector<16x128xf32>
    %316 = arith.mulf %314, %315 : vector<16x128xf32>
    %317 = arith.addf %306, %316 : vector<16x128xf32>
    %c52 = arith.constant 52 : index
    %318 = memref.load %arg3[%c52] : memref<100xf32, #tpu.memory_space<smem>>
    %c77 = arith.constant 77 : index
    %319 = memref.load %arg3[%c77] : memref<100xf32, #tpu.memory_space<smem>>
    %320 = vector.broadcast %318 : f32 to vector<1x128xf32>
    %321 = arith.mulf %0, %320 : vector<1x128xf32>
    %322 = vector.broadcast %319 : f32 to vector<1x128xf32>
    %323 = arith.mulf %2, %322 : vector<1x128xf32>
    %324 = arith.addf %321, %323 : vector<1x128xf32>
    %325 = vector.broadcast %324 : vector<1x128xf32> to vector<16x128xf32>
    %326 = arith.mulf %295, %325 : vector<16x128xf32>
    %327 = arith.addf %317, %326 : vector<16x128xf32>
    %c53 = arith.constant 53 : index
    %328 = memref.load %arg3[%c53] : memref<100xf32, #tpu.memory_space<smem>>
    %c78 = arith.constant 78 : index
    %329 = memref.load %arg3[%c78] : memref<100xf32, #tpu.memory_space<smem>>
    %330 = vector.broadcast %328 : f32 to vector<1x128xf32>
    %331 = arith.mulf %0, %330 : vector<1x128xf32>
    %332 = vector.broadcast %329 : f32 to vector<1x128xf32>
    %333 = arith.mulf %2, %332 : vector<1x128xf32>
    %334 = arith.addf %331, %333 : vector<1x128xf32>
    %c127_i32_29 = arith.constant 127 : i32
    %335 = tpu.dynamic_rotate %295 by %c127_i32_29 dim 1 : vector<16x128xf32>, i32 -> vector<16x128xf32>
    %336 = vector.broadcast %334 : vector<1x128xf32> to vector<16x128xf32>
    %337 = arith.mulf %335, %336 : vector<16x128xf32>
    %338 = arith.addf %327, %337 : vector<16x128xf32>
    %c54 = arith.constant 54 : index
    %339 = memref.load %arg3[%c54] : memref<100xf32, #tpu.memory_space<smem>>
    %c79 = arith.constant 79 : index
    %340 = memref.load %arg3[%c79] : memref<100xf32, #tpu.memory_space<smem>>
    %341 = vector.broadcast %339 : f32 to vector<1x128xf32>
    %342 = arith.mulf %0, %341 : vector<1x128xf32>
    %343 = vector.broadcast %340 : f32 to vector<1x128xf32>
    %344 = arith.mulf %2, %343 : vector<1x128xf32>
    %345 = arith.addf %342, %344 : vector<1x128xf32>
    %c126_i32_30 = arith.constant 126 : i32
    %346 = tpu.dynamic_rotate %295 by %c126_i32_30 dim 1 : vector<16x128xf32>, i32 -> vector<16x128xf32>
    %347 = vector.broadcast %345 : vector<1x128xf32> to vector<16x128xf32>
    %348 = arith.mulf %346, %347 : vector<16x128xf32>
    %349 = arith.addf %338, %348 : vector<16x128xf32>
    %350 = vector.extract_strided_slice %293 {offsets = [1, 0], sizes = [16, 128], strides = [1, 1]} : vector<20x128xf32> to vector<16x128xf32>
    %c55 = arith.constant 55 : index
    %351 = memref.load %arg3[%c55] : memref<100xf32, #tpu.memory_space<smem>>
    %c80 = arith.constant 80 : index
    %352 = memref.load %arg3[%c80] : memref<100xf32, #tpu.memory_space<smem>>
    %353 = vector.broadcast %351 : f32 to vector<1x128xf32>
    %354 = arith.mulf %0, %353 : vector<1x128xf32>
    %355 = vector.broadcast %352 : f32 to vector<1x128xf32>
    %356 = arith.mulf %2, %355 : vector<1x128xf32>
    %357 = arith.addf %354, %356 : vector<1x128xf32>
    %c2_i32_31 = arith.constant 2 : i32
    %358 = tpu.dynamic_rotate %350 by %c2_i32_31 dim 1 : vector<16x128xf32>, i32 -> vector<16x128xf32>
    %359 = vector.broadcast %357 : vector<1x128xf32> to vector<16x128xf32>
    %360 = arith.mulf %358, %359 : vector<16x128xf32>
    %361 = arith.addf %349, %360 : vector<16x128xf32>
    %c56 = arith.constant 56 : index
    %362 = memref.load %arg3[%c56] : memref<100xf32, #tpu.memory_space<smem>>
    %c81 = arith.constant 81 : index
    %363 = memref.load %arg3[%c81] : memref<100xf32, #tpu.memory_space<smem>>
    %364 = vector.broadcast %362 : f32 to vector<1x128xf32>
    %365 = arith.mulf %0, %364 : vector<1x128xf32>
    %366 = vector.broadcast %363 : f32 to vector<1x128xf32>
    %367 = arith.mulf %2, %366 : vector<1x128xf32>
    %368 = arith.addf %365, %367 : vector<1x128xf32>
    %c1_i32_32 = arith.constant 1 : i32
    %369 = tpu.dynamic_rotate %350 by %c1_i32_32 dim 1 : vector<16x128xf32>, i32 -> vector<16x128xf32>
    %370 = vector.broadcast %368 : vector<1x128xf32> to vector<16x128xf32>
    %371 = arith.mulf %369, %370 : vector<16x128xf32>
    %372 = arith.addf %361, %371 : vector<16x128xf32>
    %c57 = arith.constant 57 : index
    %373 = memref.load %arg3[%c57] : memref<100xf32, #tpu.memory_space<smem>>
    %c82 = arith.constant 82 : index
    %374 = memref.load %arg3[%c82] : memref<100xf32, #tpu.memory_space<smem>>
    %375 = vector.broadcast %373 : f32 to vector<1x128xf32>
    %376 = arith.mulf %0, %375 : vector<1x128xf32>
    %377 = vector.broadcast %374 : f32 to vector<1x128xf32>
    %378 = arith.mulf %2, %377 : vector<1x128xf32>
    %379 = arith.addf %376, %378 : vector<1x128xf32>
    %380 = vector.broadcast %379 : vector<1x128xf32> to vector<16x128xf32>
    %381 = arith.mulf %350, %380 : vector<16x128xf32>
    %382 = arith.addf %372, %381 : vector<16x128xf32>
    %c58 = arith.constant 58 : index
    %383 = memref.load %arg3[%c58] : memref<100xf32, #tpu.memory_space<smem>>
    %c83 = arith.constant 83 : index
    %384 = memref.load %arg3[%c83] : memref<100xf32, #tpu.memory_space<smem>>
    %385 = vector.broadcast %383 : f32 to vector<1x128xf32>
    %386 = arith.mulf %0, %385 : vector<1x128xf32>
    %387 = vector.broadcast %384 : f32 to vector<1x128xf32>
    %388 = arith.mulf %2, %387 : vector<1x128xf32>
    %389 = arith.addf %386, %388 : vector<1x128xf32>
    %c127_i32_33 = arith.constant 127 : i32
    %390 = tpu.dynamic_rotate %350 by %c127_i32_33 dim 1 : vector<16x128xf32>, i32 -> vector<16x128xf32>
    %391 = vector.broadcast %389 : vector<1x128xf32> to vector<16x128xf32>
    %392 = arith.mulf %390, %391 : vector<16x128xf32>
    %393 = arith.addf %382, %392 : vector<16x128xf32>
    %c59 = arith.constant 59 : index
    %394 = memref.load %arg3[%c59] : memref<100xf32, #tpu.memory_space<smem>>
    %c84 = arith.constant 84 : index
    %395 = memref.load %arg3[%c84] : memref<100xf32, #tpu.memory_space<smem>>
    %396 = vector.broadcast %394 : f32 to vector<1x128xf32>
    %397 = arith.mulf %0, %396 : vector<1x128xf32>
    %398 = vector.broadcast %395 : f32 to vector<1x128xf32>
    %399 = arith.mulf %2, %398 : vector<1x128xf32>
    %400 = arith.addf %397, %399 : vector<1x128xf32>
    %c126_i32_34 = arith.constant 126 : i32
    %401 = tpu.dynamic_rotate %350 by %c126_i32_34 dim 1 : vector<16x128xf32>, i32 -> vector<16x128xf32>
    %402 = vector.broadcast %400 : vector<1x128xf32> to vector<16x128xf32>
    %403 = arith.mulf %401, %402 : vector<16x128xf32>
    %404 = arith.addf %393, %403 : vector<16x128xf32>
    %405 = vector.extract_strided_slice %293 {offsets = [2, 0], sizes = [16, 128], strides = [1, 1]} : vector<20x128xf32> to vector<16x128xf32>
    %c60 = arith.constant 60 : index
    %406 = memref.load %arg3[%c60] : memref<100xf32, #tpu.memory_space<smem>>
    %c85 = arith.constant 85 : index
    %407 = memref.load %arg3[%c85] : memref<100xf32, #tpu.memory_space<smem>>
    %408 = vector.broadcast %406 : f32 to vector<1x128xf32>
    %409 = arith.mulf %0, %408 : vector<1x128xf32>
    %410 = vector.broadcast %407 : f32 to vector<1x128xf32>
    %411 = arith.mulf %2, %410 : vector<1x128xf32>
    %412 = arith.addf %409, %411 : vector<1x128xf32>
    %c2_i32_35 = arith.constant 2 : i32
    %413 = tpu.dynamic_rotate %405 by %c2_i32_35 dim 1 : vector<16x128xf32>, i32 -> vector<16x128xf32>
    %414 = vector.broadcast %412 : vector<1x128xf32> to vector<16x128xf32>
    %415 = arith.mulf %413, %414 : vector<16x128xf32>
    %416 = arith.addf %404, %415 : vector<16x128xf32>
    %c61 = arith.constant 61 : index
    %417 = memref.load %arg3[%c61] : memref<100xf32, #tpu.memory_space<smem>>
    %c86 = arith.constant 86 : index
    %418 = memref.load %arg3[%c86] : memref<100xf32, #tpu.memory_space<smem>>
    %419 = vector.broadcast %417 : f32 to vector<1x128xf32>
    %420 = arith.mulf %0, %419 : vector<1x128xf32>
    %421 = vector.broadcast %418 : f32 to vector<1x128xf32>
    %422 = arith.mulf %2, %421 : vector<1x128xf32>
    %423 = arith.addf %420, %422 : vector<1x128xf32>
    %c1_i32_36 = arith.constant 1 : i32
    %424 = tpu.dynamic_rotate %405 by %c1_i32_36 dim 1 : vector<16x128xf32>, i32 -> vector<16x128xf32>
    %425 = vector.broadcast %423 : vector<1x128xf32> to vector<16x128xf32>
    %426 = arith.mulf %424, %425 : vector<16x128xf32>
    %427 = arith.addf %416, %426 : vector<16x128xf32>
    %c62 = arith.constant 62 : index
    %428 = memref.load %arg3[%c62] : memref<100xf32, #tpu.memory_space<smem>>
    %c87 = arith.constant 87 : index
    %429 = memref.load %arg3[%c87] : memref<100xf32, #tpu.memory_space<smem>>
    %430 = vector.broadcast %428 : f32 to vector<1x128xf32>
    %431 = arith.mulf %0, %430 : vector<1x128xf32>
    %432 = vector.broadcast %429 : f32 to vector<1x128xf32>
    %433 = arith.mulf %2, %432 : vector<1x128xf32>
    %434 = arith.addf %431, %433 : vector<1x128xf32>
    %435 = vector.broadcast %434 : vector<1x128xf32> to vector<16x128xf32>
    %436 = arith.mulf %405, %435 : vector<16x128xf32>
    %437 = arith.addf %427, %436 : vector<16x128xf32>
    %c63 = arith.constant 63 : index
    %438 = memref.load %arg3[%c63] : memref<100xf32, #tpu.memory_space<smem>>
    %c88 = arith.constant 88 : index
    %439 = memref.load %arg3[%c88] : memref<100xf32, #tpu.memory_space<smem>>
    %440 = vector.broadcast %438 : f32 to vector<1x128xf32>
    %441 = arith.mulf %0, %440 : vector<1x128xf32>
    %442 = vector.broadcast %439 : f32 to vector<1x128xf32>
    %443 = arith.mulf %2, %442 : vector<1x128xf32>
    %444 = arith.addf %441, %443 : vector<1x128xf32>
    %c127_i32_37 = arith.constant 127 : i32
    %445 = tpu.dynamic_rotate %405 by %c127_i32_37 dim 1 : vector<16x128xf32>, i32 -> vector<16x128xf32>
    %446 = vector.broadcast %444 : vector<1x128xf32> to vector<16x128xf32>
    %447 = arith.mulf %445, %446 : vector<16x128xf32>
    %448 = arith.addf %437, %447 : vector<16x128xf32>
    %c64 = arith.constant 64 : index
    %449 = memref.load %arg3[%c64] : memref<100xf32, #tpu.memory_space<smem>>
    %c89 = arith.constant 89 : index
    %450 = memref.load %arg3[%c89] : memref<100xf32, #tpu.memory_space<smem>>
    %451 = vector.broadcast %449 : f32 to vector<1x128xf32>
    %452 = arith.mulf %0, %451 : vector<1x128xf32>
    %453 = vector.broadcast %450 : f32 to vector<1x128xf32>
    %454 = arith.mulf %2, %453 : vector<1x128xf32>
    %455 = arith.addf %452, %454 : vector<1x128xf32>
    %c126_i32_38 = arith.constant 126 : i32
    %456 = tpu.dynamic_rotate %405 by %c126_i32_38 dim 1 : vector<16x128xf32>, i32 -> vector<16x128xf32>
    %457 = vector.broadcast %455 : vector<1x128xf32> to vector<16x128xf32>
    %458 = arith.mulf %456, %457 : vector<16x128xf32>
    %459 = arith.addf %448, %458 : vector<16x128xf32>
    %460 = vector.extract_strided_slice %293 {offsets = [3, 0], sizes = [16, 128], strides = [1, 1]} : vector<20x128xf32> to vector<16x128xf32>
    %c65 = arith.constant 65 : index
    %461 = memref.load %arg3[%c65] : memref<100xf32, #tpu.memory_space<smem>>
    %c90 = arith.constant 90 : index
    %462 = memref.load %arg3[%c90] : memref<100xf32, #tpu.memory_space<smem>>
    %463 = vector.broadcast %461 : f32 to vector<1x128xf32>
    %464 = arith.mulf %0, %463 : vector<1x128xf32>
    %465 = vector.broadcast %462 : f32 to vector<1x128xf32>
    %466 = arith.mulf %2, %465 : vector<1x128xf32>
    %467 = arith.addf %464, %466 : vector<1x128xf32>
    %c2_i32_39 = arith.constant 2 : i32
    %468 = tpu.dynamic_rotate %460 by %c2_i32_39 dim 1 : vector<16x128xf32>, i32 -> vector<16x128xf32>
    %469 = vector.broadcast %467 : vector<1x128xf32> to vector<16x128xf32>
    %470 = arith.mulf %468, %469 : vector<16x128xf32>
    %471 = arith.addf %459, %470 : vector<16x128xf32>
    %c66 = arith.constant 66 : index
    %472 = memref.load %arg3[%c66] : memref<100xf32, #tpu.memory_space<smem>>
    %c91 = arith.constant 91 : index
    %473 = memref.load %arg3[%c91] : memref<100xf32, #tpu.memory_space<smem>>
    %474 = vector.broadcast %472 : f32 to vector<1x128xf32>
    %475 = arith.mulf %0, %474 : vector<1x128xf32>
    %476 = vector.broadcast %473 : f32 to vector<1x128xf32>
    %477 = arith.mulf %2, %476 : vector<1x128xf32>
    %478 = arith.addf %475, %477 : vector<1x128xf32>
    %c1_i32_40 = arith.constant 1 : i32
    %479 = tpu.dynamic_rotate %460 by %c1_i32_40 dim 1 : vector<16x128xf32>, i32 -> vector<16x128xf32>
    %480 = vector.broadcast %478 : vector<1x128xf32> to vector<16x128xf32>
    %481 = arith.mulf %479, %480 : vector<16x128xf32>
    %482 = arith.addf %471, %481 : vector<16x128xf32>
    %c67 = arith.constant 67 : index
    %483 = memref.load %arg3[%c67] : memref<100xf32, #tpu.memory_space<smem>>
    %c92 = arith.constant 92 : index
    %484 = memref.load %arg3[%c92] : memref<100xf32, #tpu.memory_space<smem>>
    %485 = vector.broadcast %483 : f32 to vector<1x128xf32>
    %486 = arith.mulf %0, %485 : vector<1x128xf32>
    %487 = vector.broadcast %484 : f32 to vector<1x128xf32>
    %488 = arith.mulf %2, %487 : vector<1x128xf32>
    %489 = arith.addf %486, %488 : vector<1x128xf32>
    %490 = vector.broadcast %489 : vector<1x128xf32> to vector<16x128xf32>
    %491 = arith.mulf %460, %490 : vector<16x128xf32>
    %492 = arith.addf %482, %491 : vector<16x128xf32>
    %c68 = arith.constant 68 : index
    %493 = memref.load %arg3[%c68] : memref<100xf32, #tpu.memory_space<smem>>
    %c93 = arith.constant 93 : index
    %494 = memref.load %arg3[%c93] : memref<100xf32, #tpu.memory_space<smem>>
    %495 = vector.broadcast %493 : f32 to vector<1x128xf32>
    %496 = arith.mulf %0, %495 : vector<1x128xf32>
    %497 = vector.broadcast %494 : f32 to vector<1x128xf32>
    %498 = arith.mulf %2, %497 : vector<1x128xf32>
    %499 = arith.addf %496, %498 : vector<1x128xf32>
    %c127_i32_41 = arith.constant 127 : i32
    %500 = tpu.dynamic_rotate %460 by %c127_i32_41 dim 1 : vector<16x128xf32>, i32 -> vector<16x128xf32>
    %501 = vector.broadcast %499 : vector<1x128xf32> to vector<16x128xf32>
    %502 = arith.mulf %500, %501 : vector<16x128xf32>
    %503 = arith.addf %492, %502 : vector<16x128xf32>
    %c69 = arith.constant 69 : index
    %504 = memref.load %arg3[%c69] : memref<100xf32, #tpu.memory_space<smem>>
    %c94 = arith.constant 94 : index
    %505 = memref.load %arg3[%c94] : memref<100xf32, #tpu.memory_space<smem>>
    %506 = vector.broadcast %504 : f32 to vector<1x128xf32>
    %507 = arith.mulf %0, %506 : vector<1x128xf32>
    %508 = vector.broadcast %505 : f32 to vector<1x128xf32>
    %509 = arith.mulf %2, %508 : vector<1x128xf32>
    %510 = arith.addf %507, %509 : vector<1x128xf32>
    %c126_i32_42 = arith.constant 126 : i32
    %511 = tpu.dynamic_rotate %460 by %c126_i32_42 dim 1 : vector<16x128xf32>, i32 -> vector<16x128xf32>
    %512 = vector.broadcast %510 : vector<1x128xf32> to vector<16x128xf32>
    %513 = arith.mulf %511, %512 : vector<16x128xf32>
    %514 = arith.addf %503, %513 : vector<16x128xf32>
    %515 = vector.extract_strided_slice %293 {offsets = [4, 0], sizes = [16, 128], strides = [1, 1]} : vector<20x128xf32> to vector<16x128xf32>
    %c70 = arith.constant 70 : index
    %516 = memref.load %arg3[%c70] : memref<100xf32, #tpu.memory_space<smem>>
    %c95 = arith.constant 95 : index
    %517 = memref.load %arg3[%c95] : memref<100xf32, #tpu.memory_space<smem>>
    %518 = vector.broadcast %516 : f32 to vector<1x128xf32>
    %519 = arith.mulf %0, %518 : vector<1x128xf32>
    %520 = vector.broadcast %517 : f32 to vector<1x128xf32>
    %521 = arith.mulf %2, %520 : vector<1x128xf32>
    %522 = arith.addf %519, %521 : vector<1x128xf32>
    %c2_i32_43 = arith.constant 2 : i32
    %523 = tpu.dynamic_rotate %515 by %c2_i32_43 dim 1 : vector<16x128xf32>, i32 -> vector<16x128xf32>
    %524 = vector.broadcast %522 : vector<1x128xf32> to vector<16x128xf32>
    %525 = arith.mulf %523, %524 : vector<16x128xf32>
    %526 = arith.addf %514, %525 : vector<16x128xf32>
    %c71 = arith.constant 71 : index
    %527 = memref.load %arg3[%c71] : memref<100xf32, #tpu.memory_space<smem>>
    %c96 = arith.constant 96 : index
    %528 = memref.load %arg3[%c96] : memref<100xf32, #tpu.memory_space<smem>>
    %529 = vector.broadcast %527 : f32 to vector<1x128xf32>
    %530 = arith.mulf %0, %529 : vector<1x128xf32>
    %531 = vector.broadcast %528 : f32 to vector<1x128xf32>
    %532 = arith.mulf %2, %531 : vector<1x128xf32>
    %533 = arith.addf %530, %532 : vector<1x128xf32>
    %c1_i32_44 = arith.constant 1 : i32
    %534 = tpu.dynamic_rotate %515 by %c1_i32_44 dim 1 : vector<16x128xf32>, i32 -> vector<16x128xf32>
    %535 = vector.broadcast %533 : vector<1x128xf32> to vector<16x128xf32>
    %536 = arith.mulf %534, %535 : vector<16x128xf32>
    %537 = arith.addf %526, %536 : vector<16x128xf32>
    %c72 = arith.constant 72 : index
    %538 = memref.load %arg3[%c72] : memref<100xf32, #tpu.memory_space<smem>>
    %c97 = arith.constant 97 : index
    %539 = memref.load %arg3[%c97] : memref<100xf32, #tpu.memory_space<smem>>
    %540 = vector.broadcast %538 : f32 to vector<1x128xf32>
    %541 = arith.mulf %0, %540 : vector<1x128xf32>
    %542 = vector.broadcast %539 : f32 to vector<1x128xf32>
    %543 = arith.mulf %2, %542 : vector<1x128xf32>
    %544 = arith.addf %541, %543 : vector<1x128xf32>
    %545 = vector.broadcast %544 : vector<1x128xf32> to vector<16x128xf32>
    %546 = arith.mulf %515, %545 : vector<16x128xf32>
    %547 = arith.addf %537, %546 : vector<16x128xf32>
    %c73 = arith.constant 73 : index
    %548 = memref.load %arg3[%c73] : memref<100xf32, #tpu.memory_space<smem>>
    %c98 = arith.constant 98 : index
    %549 = memref.load %arg3[%c98] : memref<100xf32, #tpu.memory_space<smem>>
    %550 = vector.broadcast %548 : f32 to vector<1x128xf32>
    %551 = arith.mulf %0, %550 : vector<1x128xf32>
    %552 = vector.broadcast %549 : f32 to vector<1x128xf32>
    %553 = arith.mulf %2, %552 : vector<1x128xf32>
    %554 = arith.addf %551, %553 : vector<1x128xf32>
    %c127_i32_45 = arith.constant 127 : i32
    %555 = tpu.dynamic_rotate %515 by %c127_i32_45 dim 1 : vector<16x128xf32>, i32 -> vector<16x128xf32>
    %556 = vector.broadcast %554 : vector<1x128xf32> to vector<16x128xf32>
    %557 = arith.mulf %555, %556 : vector<16x128xf32>
    %558 = arith.addf %547, %557 : vector<16x128xf32>
    %c74 = arith.constant 74 : index
    %559 = memref.load %arg3[%c74] : memref<100xf32, #tpu.memory_space<smem>>
    %c99 = arith.constant 99 : index
    %560 = memref.load %arg3[%c99] : memref<100xf32, #tpu.memory_space<smem>>
    %561 = vector.broadcast %559 : f32 to vector<1x128xf32>
    %562 = arith.mulf %0, %561 : vector<1x128xf32>
    %563 = vector.broadcast %560 : f32 to vector<1x128xf32>
    %564 = arith.mulf %2, %563 : vector<1x128xf32>
    %565 = arith.addf %562, %564 : vector<1x128xf32>
    %c126_i32_46 = arith.constant 126 : i32
    %566 = tpu.dynamic_rotate %515 by %c126_i32_46 dim 1 : vector<16x128xf32>, i32 -> vector<16x128xf32>
    %567 = vector.broadcast %565 : vector<1x128xf32> to vector<16x128xf32>
    %568 = arith.mulf %566, %567 : vector<16x128xf32>
    %569 = arith.addf %558, %568 : vector<16x128xf32>
    %c2_47 = arith.constant 2 : index
    %570 = memref.load %arg4[%c2_47] : memref<4xf32, #tpu.memory_space<smem>>
    %571 = vector.broadcast %570 : f32 to vector<1x128xf32>
    %572 = arith.mulf %0, %571 : vector<1x128xf32>
    %c3_48 = arith.constant 3 : index
    %573 = memref.load %arg4[%c3_48] : memref<4xf32, #tpu.memory_space<smem>>
    %574 = vector.broadcast %573 : f32 to vector<1x128xf32>
    %575 = arith.mulf %2, %574 : vector<1x128xf32>
    %576 = arith.addf %572, %575 : vector<1x128xf32>
    %577 = vector.broadcast %576 : vector<1x128xf32> to vector<16x128xf32>
    %578 = arith.addf %569, %577 : vector<16x128xf32>
    %579 = vector.broadcast %3 : vector<1x128xf32> to vector<16x128xf32>
    %580 = arith.mulf %578, %579 : vector<16x128xf32>
    %c0_49 = arith.constant 0 : index
    %c0_50 = arith.constant 0 : index
    %581 = vector.load %arg5[%c0_49, %c0_50] : memref<16x128xf32, #tpu.memory_space<vmem>>, vector<16x128xf32>
    tpu.vector_store %arg5[%c0_49, %c0_50], %580 {strides = array<i32>} : memref<16x128xf32, #tpu.memory_space<vmem>>, vector<16x128xf32>,
    return
  }
}

</mosaic_0001>

<llo_original>
// kernel: tpu_custom_call.1
$region0: #{tpu_custom_call.1}
  #allocation0 [shape = 'u32[]', space=smem, size = 0x4, offset = 0x4, fixed_abs, tag = 'smem constant byte address 0x4 - core index']
  #allocation1 [shape = 'u32[144,128]{1,0:T(1,128)}', space=vmem, size = 0x12000, scoped, tag = 'internal scratch']
  %s0 = inlined_call_operand.hbm [shape: f32[24,128], index: 0, kind: input, shape index: {}]
  %s1 = inlined_call_operand.vmem [shape: f32[1,128], index: 1, kind: input, shape index: {}]
  %s2 = inlined_call_operand.vmem [shape: f32[1,128], index: 2, kind: input, shape index: {}]
  %s3 = inlined_call_operand.vmem [shape: f32[100], index: 3, kind: input, shape index: {}]
  %s4 = inlined_call_operand.vmem [shape: f32[4], index: 4, kind: input, shape index: {}]
  %s5 = inlined_call_operand.hbm [shape: f32[16,128], index: 5, kind: output, shape index: {}]
  %s6 = sld [smem:[#allocation0]]
  $region42: #{tpu_custom_call.1} parent=0
    _
  %s8 = ssub.s32 1, %s6
  %s9 = scalar_select 0, %s8, %s6
  $region1: #{tpu_custom_call.1} parent=0
    #allocation2 [shape = 'u8[12288]{0}', space=vmem, size = 0x3000, scoped, tag = 'input window, operand 0, single buffered']
    #allocation3 [shape = 's32[1]{0}', space=sflag, size = 0x4, scoped, tag = 'scoped memory for tpu_custom_call.1']
    #allocation4 [shape = 's32[1]{0}', space=sflag, size = 0x4, scoped, tag = 'scoped memory for tpu_custom_call.1']
    #allocation5 [shape = 's32[1]{0}', space=sflag, size = 0x4, scoped, tag = 'scoped memory for tpu_custom_call.1']
    #allocation6 [shape = 'u8[512]{0}', space=smem, size = 0x200, scoped, tag = 'input window, operand 3, single buffered']
    #allocation7 [shape = 'u8[512]{0}', space=smem, size = 0x200, scoped, tag = 'input window, operand 4, single buffered']
    #allocation8 [shape = 's32[1]{0}', space=sflag, size = 0x4, scoped, tag = 'scoped memory for tpu_custom_call.1']
    #allocation9 [shape = 'u8[8192]{0}', space=vmem, size = 0x2000, scoped, tag = 'output window, operand 0, single buffered']
    %10 = vsyncpa [#allocation3], 0
    %11 = vsyncpa [#allocation5], 0
    %12 = vsyncpa [#allocation8], 0
    %13 = vsyncpa [#allocation4], 0
    // Predicated region
    $region2: #{tpu_custom_call.1} parent=1 // pred_check
      _
    $region3: #{tpu_custom_call.1} parent=1 // pred_check_branch
      %15 = sbr.rel (0) target = $region5
    $region4: #{tpu_custom_call.1} parent=1 // pred_region
      %s17 = ssub.s32 384, 384
      %18 = vsyncadd [#allocation3], %s17
      %s19 = sshll.u32 [#allocation2], 4
      %s20 = int_to_ptr.vmem [resolvable:$true] %s19
      %25 = dma.hbm_to_vmem [thread:$0]  %s0, 384, %s20, [#allocation3], 128, 128, 8
    $region5: #{tpu_custom_call.1} parent=1 // pred_fallthru
      _
    // Predicated region
    $region6: #{tpu_custom_call.1} parent=1 // pred_check
      _
    $region7: #{tpu_custom_call.1} parent=1 // pred_check_branch
      %27 = sbr.rel (0) target = $region9
    $region8: #{tpu_custom_call.1} parent=1 // pred_region
      _
    $region9: #{tpu_custom_call.1} parent=1 // pred_fallthru
      _
    // Predicated region
    $region10: #{tpu_custom_call.1} parent=1 // pred_check
      _
    $region11: #{tpu_custom_call.1} parent=1 // pred_check_branch
      %29 = sbr.rel (0) target = $region13
    $region12: #{tpu_custom_call.1} parent=1 // pred_region
      _
    $region13: #{tpu_custom_call.1} parent=1 // pred_fallthru
      _
    // Predicated region
    $region14: #{tpu_custom_call.1} parent=1 // pred_check
      _
    $region15: #{tpu_custom_call.1} parent=1 // pred_check_branch
      %31 = sbr.rel (0) target = $region17
    $region16: #{tpu_custom_call.1} parent=1 // pred_region
      %s33 = ssub.s32 16, 16
      %34 = vsyncadd [#allocation5], %s33
      %s36 = sshll.u32 %s3, 4
      %s37 = int_to_ptr.vmem [resolvable:$true] %s36
      %39 = dma.vmem_to_smem %s37, 16, [#allocation6], [#allocation5]
    $region17: #{tpu_custom_call.1} parent=1 // pred_fallthru
      _
    // Predicated region
    $region18: #{tpu_custom_call.1} parent=1 // pred_check
      _
    $region19: #{tpu_custom_call.1} parent=1 // pred_check_branch
      %41 = sbr.rel (0) target = $region21
    $region20: #{tpu_custom_call.1} parent=1 // pred_region
      %s43 = ssub.s32 16, 16
      %44 = vsyncadd [#allocation8], %s43
      %s46 = sshll.u32 %s4, 4
      %s47 = int_to_ptr.vmem [resolvable:$true] %s46
      %49 = dma.vmem_to_smem %s47, 16, [#allocation7], [#allocation8]
    $region21: #{tpu_custom_call.1} parent=1 // pred_fallthru
      _
    // Predicated region
    $region22: #{tpu_custom_call.1} parent=1 // pred_check
      _
    $region23: #{tpu_custom_call.1} parent=1 // pred_check_branch
      %51 = sbr.rel (0) target = $region25
    $region24: #{tpu_custom_call.1} parent=1 // pred_region
      %52 = dma.done [#allocation3], 384
    $region25: #{tpu_custom_call.1} parent=1 // pred_fallthru
      _
    // Predicated region
    $region26: #{tpu_custom_call.1} parent=1 // pred_check
      _
    $region27: #{tpu_custom_call.1} parent=1 // pred_check_branch
      %54 = sbr.rel (0) target = $region29
    $region28: #{tpu_custom_call.1} parent=1 // pred_region
      %55 = dma.done [#allocation5], 16
    $region29: #{tpu_custom_call.1} parent=1 // pred_fallthru
      _
    // Predicated region
    $region30: #{tpu_custom_call.1} parent=1 // pred_check
      _
    $region31: #{tpu_custom_call.1} parent=1 // pred_check_branch
      %57 = sbr.rel (0) target = $region33
    $region32: #{tpu_custom_call.1} parent=1 // pred_region
      %58 = dma.done [#allocation8], 16
    $region33: #{tpu_custom_call.1} parent=1 // pred_fallthru
      _
    %59 = sfence
    %v60 = vld [vmem:[%s1] sm:$0x1]
    %v61 = vsub.f32 1.0, %v60
    %v62 = vld [vmem:[%s2] sm:$0x1]
    %v63 = vld [vmem:[#allocation2] sm:$0xff]
    %v64 = vld [vmem:[#allocation2 + $0x8] sm:$0xff]
    %v65 = vld [vmem:[#allocation2 + $0x10] sm:$0xff]
    %s66 = sld [smem:[#allocation6]]
    %s67 = sld [smem:[#allocation6 + $0x19]]
    %v68 = vstv %s66
    %v69 = vmul.f32 %v60, %v68
    %v70 = vstv %s67
    %v71 = vmul.f32 %v61, %v70
    %v72 = vadd.f32 %v69, %v71
    %73 = vrot.lane.b32.xlu0 %v63, 2
    %v74 = vpop.permute.xlu0 %73
    %75 = vrot.lane.b32.xlu0 %v64, 2
    %v76 = vpop.permute.xlu0 %75
    %v78 = vlaneseq
    %v79 = vshrl.u32 %v78, 7
    %v80 = vsub.s32 0, %v79
    %v81 = vrot.slane %v72, %v80
    %v83 = vmul.f32 %v74, %v81
    %v84 = vmul.f32 %v76, %v81
    %v85 = vadd.f32 %v83, 0.0
    %v86 = vadd.f32 %v84, 0.0
    %s87 = sld [smem:[#allocation6 + $0x1]]
    %s88 = sld [smem:[#allocation6 + $0x1a]]
    %v89 = vstv %s87
    %v90 = vmul.f32 %v60, %v89
    %v91 = vstv %s88
    %v92 = vmul.f32 %v61, %v91
    %v93 = vadd.f32 %v90, %v92
    %94 = vrot.lane.b32.xlu0 %v63, 1
    %v95 = vpop.permute.xlu0 %94
    %96 = vrot.lane.b32.xlu0 %v64, 1
    %v97 = vpop.permute.xlu0 %96
    %v99 = vlaneseq
    %v100 = vshrl.u32 %v99, 7
    %v101 = vsub.s32 0, %v100
    %v102 = vrot.slane %v93, %v101
    %v104 = vmul.f32 %v95, %v102
    %v105 = vmul.f32 %v97, %v102
    %v106 = vadd.f32 %v85, %v104
    %v107 = vadd.f32 %v86, %v105
    %s108 = sld [smem:[#allocation6 + $0x2]]
    %s109 = sld [smem:[#allocation6 + $0x1b]]
    %v110 = vstv %s108
    %v111 = vmul.f32 %v60, %v110
    %v112 = vstv %s109
    %v113 = vmul.f32 %v61, %v112
    %v114 = vadd.f32 %v111, %v113
    %v116 = vlaneseq
    %v117 = vshrl.u32 %v116, 7
    %v118 = vsub.s32 0, %v117
    %v119 = vrot.slane %v114, %v118
    %v121 = vmul.f32 %v63, %v119
    %v122 = vmul.f32 %v64, %v119
    %v123 = vadd.f32 %v106, %v121
    %v124 = vadd.f32 %v107, %v122
    %s125 = sld [smem:[#allocation6 + $0x3]]
    %s126 = sld [smem:[#allocation6 + $0x1c]]
    %v127 = vstv %s125
    %v128 = vmul.f32 %v60, %v127
    %v129 = vstv %s126
    %v130 = vmul.f32 %v61, %v129
    %v131 = vadd.f32 %v128, %v130
    %132 = vrot.lane.b32.xlu0 %v63, 127
    %v133 = vpop.permute.xlu0 %132
    %134 = vrot.lane.b32.xlu0 %v64, 127
    %v135 = vpop.permute.xlu0 %134
    %v137 = vlaneseq
    %v138 = vshrl.u32 %v137, 7
    %v139 = vsub.s32 0, %v138
    %v140 = vrot.slane %v131, %v139
    %v142 = vmul.f32 %v133, %v140
    %v143 = vmul.f32 %v135, %v140
    %v144 = vadd.f32 %v123, %v142
    %v145 = vadd.f32 %v124, %v143
    %s146 = sld [smem:[#allocation6 + $0x4]]
    %s147 = sld [smem:[#allocation6 + $0x1d]]
    %v148 = vstv %s146
    %v149 = vmul.f32 %v60, %v148
    %v150 = vstv %s147
    %v151 = vmul.f32 %v61, %v150
    %v152 = vadd.f32 %v149, %v151
    %153 = vrot.lane.b32.xlu0 %v63, 126
    %v154 = vpop.permute.xlu0 %153
    %155 = vrot.lane.b32.xlu0 %v64, 126
    %v156 = vpop.permute.xlu0 %155
    %v158 = vlaneseq
    %v159 = vshrl.u32 %v158, 7
    %v160 = vsub.s32 0, %v159
    %v161 = vrot.slane %v152, %v160
    %v163 = vmul.f32 %v154, %v161
    %v164 = vmul.f32 %v156, %v161
    %v165 = vadd.f32 %v144, %v163
    %v166 = vadd.f32 %v145, %v164
    %s167 = sld [smem:[#allocation6 + $0x5]]
    %s168 = sld [smem:[#allocation6 + $0x1e]]
    %v169 = vstv %s167
    %v170 = vmul.f32 %v60, %v169
    %v171 = vstv %s168
    %v172 = vmul.f32 %v61, %v171
    %v173 = vadd.f32 %v170, %v172
    %vm177 = vcmask 1046528
    %v178 = vrot.slane %v63, 1
    %v179 = vrot.slane %v64, 1
    %v180 = vsel %vm177, %v178, %v179
    %v181 = vrot.slane %v65, 1
    %v182 = vsel %vm177, %v179, %v181
    %185 = vrot.lane.b32.xlu0 %v180, 2
    %v186 = vpop.permute.xlu0 %185
    %187 = vrot.lane.b32.xlu0 %v182, 2
    %v188 = vpop.permute.xlu0 %187
    %v190 = vlaneseq
    %v191 = vshrl.u32 %v190, 7
    %v192 = vsub.s32 0, %v191
    %v193 = vrot.slane %v173, %v192
    %v195 = vmul.f32 %v186, %v193
    %v196 = vmul.f32 %v188, %v193
    %v197 = vadd.f32 %v165, %v195
    %v198 = vadd.f32 %v166, %v196
    %s199 = sld [smem:[#allocation6 + $0x6]]
    %s200 = sld [smem:[#allocation6 + $0x1f]]
    %v201 = vstv %s199
    %v202 = vmul.f32 %v60, %v201
    %v203 = vstv %s200
    %v204 = vmul.f32 %v61, %v203
    %v205 = vadd.f32 %v202, %v204
    %206 = vrot.lane.b32.xlu0 %v180, 1
    %v207 = vpop.permute.xlu0 %206
    %208 = vrot.lane.b32.xlu0 %v182, 1
    %v209 = vpop.permute.xlu0 %208
    %v211 = vlaneseq
    %v212 = vshrl.u32 %v211, 7
    %v213 = vsub.s32 0, %v212
    %v214 = vrot.slane %v205, %v213
    %v216 = vmul.f32 %v207, %v214
    %v217 = vmul.f32 %v209, %v214
    %v218 = vadd.f32 %v197, %v216
    %v219 = vadd.f32 %v198, %v217
    %s220 = sld [smem:[#allocation6 + $0x7]]
    %s221 = sld [smem:[#allocation6 + $0x20]]
    %v222 = vstv %s220
    %v223 = vmul.f32 %v60, %v222
    %v224 = vstv %s221
    %v225 = vmul.f32 %v61, %v224
    %v226 = vadd.f32 %v223, %v225
    %v228 = vlaneseq
    %v229 = vshrl.u32 %v228, 7
    %v230 = vsub.s32 0, %v229
    %v231 = vrot.slane %v226, %v230
    %v233 = vmul.f32 %v63, %v231
    %v234 = vmul.f32 %v64, %v231
    %v235 = vmul.f32 %v65, %v231
    %v239 = vrot.slane %v233, 1
    %v240 = vrot.slane %v234, 1
    %v241 = vsel %vm177, %v239, %v240
    %v242 = vrot.slane %v235, 1
    %v243 = vsel %vm177, %v240, %v242
    %v246 = vadd.f32 %v218, %v241
    %v247 = vadd.f32 %v219, %v243
    %s248 = sld [smem:[#allocation6 + $0x8]]
    %s249 = sld [smem:[#allocation6 + $0x21]]
    %v250 = vstv %s248
    %v251 = vmul.f32 %v60, %v250
    %v252 = vstv %s249
    %v253 = vmul.f32 %v61, %v252
    %v254 = vadd.f32 %v251, %v253
    %255 = vrot.lane.b32.xlu0 %v180, 127
    %v256 = vpop.permute.xlu0 %255
    %257 = vrot.lane.b32.xlu0 %v182, 127
    %v258 = vpop.permute.xlu0 %257
    %v260 = vlaneseq
    %v261 = vshrl.u32 %v260, 7
    %v262 = vsub.s32 0, %v261
    %v263 = vrot.slane %v254, %v262
    %v265 = vmul.f32 %v256, %v263
    %v266 = vmul.f32 %v258, %v263
    %v267 = vadd.f32 %v246, %v265
    %v268 = vadd.f32 %v247, %v266
    %s269 = sld [smem:[#allocation6 + $0x9]]
    %s270 = sld [smem:[#allocation6 + $0x22]]
    %v271 = vstv %s269
    %v272 = vmul.f32 %v60, %v271
    %v273 = vstv %s270
    %v274 = vmul.f32 %v61, %v273
    %v275 = vadd.f32 %v272, %v274
    %276 = vrot.lane.b32.xlu0 %v180, 126
    %v277 = vpop.permute.xlu0 %276
    %278 = vrot.lane.b32.xlu0 %v182, 126
    %v279 = vpop.permute.xlu0 %278
    %v281 = vlaneseq
    %v282 = vshrl.u32 %v281, 7
    %v283 = vsub.s32 0, %v282
    %v284 = vrot.slane %v275, %v283
    %v286 = vmul.f32 %v277, %v284
    %v287 = vmul.f32 %v279, %v284
    %v288 = vadd.f32 %v267, %v286
    %v289 = vadd.f32 %v268, %v287
    %s290 = sld [smem:[#allocation6 + $0xa]]
    %s291 = sld [smem:[#allocation6 + $0x23]]
    %v292 = vstv %s290
    %v293 = vmul.f32 %v60, %v292
    %v294 = vstv %s291
    %v295 = vmul.f32 %v61, %v294
    %v296 = vadd.f32 %v293, %v295
    %vm297 = vcmask 1045504
    %v298 = vrot.slane %v63, 2
    %v299 = vrot.slane %v64, 2
    %v300 = vsel %vm297, %v298, %v299
    %v301 = vrot.slane %v65, 2
    %v302 = vsel %vm297, %v299, %v301
    %305 = vrot.lane.b32.xlu0 %v300, 2
    %v306 = vpop.permute.xlu0 %305
    %307 = vrot.lane.b32.xlu0 %v302, 2
    %v308 = vpop.permute.xlu0 %307
    %v310 = vlaneseq
    %v311 = vshrl.u32 %v310, 7
    %v312 = vsub.s32 0, %v311
    %v313 = vrot.slane %v296, %v312
    %v315 = vmul.f32 %v306, %v313
    %v316 = vmul.f32 %v308, %v313
    %v317 = vadd.f32 %v288, %v315
    %v318 = vadd.f32 %v289, %v316
    %s319 = sld [smem:[#allocation6 + $0xb]]
    %s320 = sld [smem:[#allocation6 + $0x24]]
    %v321 = vstv %s319
    %v322 = vmul.f32 %v60, %v321
    %v323 = vstv %s320
    %v324 = vmul.f32 %v61, %v323
    %v325 = vadd.f32 %v322, %v324
    %326 = vrot.lane.b32.xlu0 %v300, 1
    %v327 = vpop.permute.xlu0 %326
    %328 = vrot.lane.b32.xlu0 %v302, 1
    %v329 = vpop.permute.xlu0 %328
    %v331 = vlaneseq
    %v332 = vshrl.u32 %v331, 7
    %v333 = vsub.s32 0, %v332
    %v334 = vrot.slane %v325, %v333
    %v336 = vmul.f32 %v327, %v334
    %v337 = vmul.f32 %v329, %v334
    %v338 = vadd.f32 %v317, %v336
    %v339 = vadd.f32 %v318, %v337
    %s340 = sld [smem:[#allocation6 + $0xc]]
    %s341 = sld [smem:[#allocation6 + $0x25]]
    %v342 = vstv %s340
    %v343 = vmul.f32 %v60, %v342
    %v344 = vstv %s341
    %v345 = vmul.f32 %v61, %v344
    %v346 = vadd.f32 %v343, %v345
    %v348 = vlaneseq
    %v349 = vshrl.u32 %v348, 7
    %v350 = vsub.s32 0, %v349
    %v351 = vrot.slane %v346, %v350
    %v353 = vmul.f32 %v63, %v351
    %v354 = vmul.f32 %v64, %v351
    %v355 = vmul.f32 %v65, %v351
    %v359 = vrot.slane %v353, 2
    %v360 = vrot.slane %v354, 2
    %v361 = vsel %vm297, %v359, %v360
    %v362 = vrot.slane %v355, 2
    %v363 = vsel %vm297, %v360, %v362
    %v366 = vadd.f32 %v338, %v361
    %v367 = vadd.f32 %v339, %v363
    %s368 = sld [smem:[#allocation6 + $0xd]]
    %s369 = sld [smem:[#allocation6 + $0x26]]
    %v370 = vstv %s368
    %v371 = vmul.f32 %v60, %v370
    %v372 = vstv %s369
    %v373 = vmul.f32 %v61, %v372
    %v374 = vadd.f32 %v371, %v373
    %375 = vrot.lane.b32.xlu0 %v300, 127
    %v376 = vpop.permute.xlu0 %375
    %377 = vrot.lane.b32.xlu0 %v302, 127
    %v378 = vpop.permute.xlu0 %377
    %v380 = vlaneseq
    %v381 = vshrl.u32 %v380, 7
    %v382 = vsub.s32 0, %v381
    %v383 = vrot.slane %v374, %v382
    %v385 = vmul.f32 %v376, %v383
    %v386 = vmul.f32 %v378, %v383
    %v387 = vadd.f32 %v366, %v385
    %v388 = vadd.f32 %v367, %v386
    %s389 = sld [smem:[#allocation6 + $0xe]]
    %s390 = sld [smem:[#allocation6 + $0x27]]
    %v391 = vstv %s389
    %v392 = vmul.f32 %v60, %v391
    %v393 = vstv %s390
    %v394 = vmul.f32 %v61, %v393
    %v395 = vadd.f32 %v392, %v394
    %396 = vrot.lane.b32.xlu0 %v300, 126
    %v397 = vpop.permute.xlu0 %396
    %398 = vrot.lane.b32.xlu0 %v302, 126
    %v399 = vpop.permute.xlu0 %398
    %v401 = vlaneseq
    %v402 = vshrl.u32 %v401, 7
    %v403 = vsub.s32 0, %v402
    %v404 = vrot.slane %v395, %v403
    %v406 = vmul.f32 %v397, %v404
    %v407 = vmul.f32 %v399, %v404
    %v408 = vadd.f32 %v387, %v406
    %v409 = vadd.f32 %v388, %v407
    %s410 = sld [smem:[#allocation6 + $0xf]]
    %s411 = sld [smem:[#allocation6 + $0x28]]
    %v412 = vstv %s410
    %v413 = vmul.f32 %v60, %v412
    %v414 = vstv %s411
    %v415 = vmul.f32 %v61, %v414
    %v416 = vadd.f32 %v413, %v415
    %vm417 = vcmask 1044480
    %v418 = vrot.slane %v63, 3
    %v419 = vrot.slane %v64, 3
    %v420 = vsel %vm417, %v418, %v419
    %v421 = vrot.slane %v65, 3
    %v422 = vsel %vm417, %v419, %v421
    %425 = vrot.lane.b32.xlu0 %v420, 2
    %v426 = vpop.permute.xlu0 %425
    %427 = vrot.lane.b32.xlu0 %v422, 2
    %v428 = vpop.permute.xlu0 %427
    %v430 = vlaneseq
    %v431 = vshrl.u32 %v430, 7
    %v432 = vsub.s32 0, %v431
    %v433 = vrot.slane %v416, %v432
    %v435 = vmul.f32 %v426, %v433
    %v436 = vmul.f32 %v428, %v433
    %v437 = vadd.f32 %v408, %v435
    %v438 = vadd.f32 %v409, %v436
    %s439 = sld [smem:[#allocation6 + $0x10]]
    %s440 = sld [smem:[#allocation6 + $0x29]]
    %v441 = vstv %s439
    %v442 = vmul.f32 %v60, %v441
    %v443 = vstv %s440
    %v444 = vmul.f32 %v61, %v443
    %v445 = vadd.f32 %v442, %v444
    %446 = vrot.lane.b32.xlu0 %v420, 1
    %v447 = vpop.permute.xlu0 %446
    %448 = vrot.lane.b32.xlu0 %v422, 1
    %v449 = vpop.permute.xlu0 %448
    %v451 = vlaneseq
    %v452 = vshrl.u32 %v451, 7
    %v453 = vsub.s32 0, %v452
    %v454 = vrot.slane %v445, %v453
    %v456 = vmul.f32 %v447, %v454
    %v457 = vmul.f32 %v449, %v454
    %v458 = vadd.f32 %v437, %v456
    %v459 = vadd.f32 %v438, %v457
    %s460 = sld [smem:[#allocation6 + $0x11]]
    %s461 = sld [smem:[#allocation6 + $0x2a]]
    %v462 = vstv %s460
    %v463 = vmul.f32 %v60, %v462
    %v464 = vstv %s461
    %v465 = vmul.f32 %v61, %v464
    %v466 = vadd.f32 %v463, %v465
    %v468 = vlaneseq
    %v469 = vshrl.u32 %v468, 7
    %v470 = vsub.s32 0, %v469
    %v471 = vrot.slane %v466, %v470
    %v473 = vmul.f32 %v63, %v471
    %v474 = vmul.f32 %v64, %v471
    %v475 = vmul.f32 %v65, %v471
    %v479 = vrot.slane %v473, 3
    %v480 = vrot.slane %v474, 3
    %v481 = vsel %vm417, %v479, %v480
    %v482 = vrot.slane %v475, 3
    %v483 = vsel %vm417, %v480, %v482
    %v486 = vadd.f32 %v458, %v481
    %v487 = vadd.f32 %v459, %v483
    %s488 = sld [smem:[#allocation6 + $0x12]]
    %s489 = sld [smem:[#allocation6 + $0x2b]]
    %v490 = vstv %s488
    %v491 = vmul.f32 %v60, %v490
    %v492 = vstv %s489
    %v493 = vmul.f32 %v61, %v492
    %v494 = vadd.f32 %v491, %v493
    %495 = vrot.lane.b32.xlu0 %v420, 127
    %v496 = vpop.permute.xlu0 %495
    %497 = vrot.lane.b32.xlu0 %v422, 127
    %v498 = vpop.permute.xlu0 %497
    %v500 = vlaneseq
    %v501 = vshrl.u32 %v500, 7
    %v502 = vsub.s32 0, %v501
    %v503 = vrot.slane %v494, %v502
    %v505 = vmul.f32 %v496, %v503
    %v506 = vmul.f32 %v498, %v503
    %v507 = vadd.f32 %v486, %v505
    %v508 = vadd.f32 %v487, %v506
    %s509 = sld [smem:[#allocation6 + $0x13]]
    %s510 = sld [smem:[#allocation6 + $0x2c]]
    %v511 = vstv %s509
    %v512 = vmul.f32 %v60, %v511
    %v513 = vstv %s510
    %v514 = vmul.f32 %v61, %v513
    %v515 = vadd.f32 %v512, %v514
    %516 = vrot.lane.b32.xlu0 %v420, 126
    %v517 = vpop.permute.xlu0 %516
    %518 = vrot.lane.b32.xlu0 %v422, 126
    %v519 = vpop.permute.xlu0 %518
    %v521 = vlaneseq
    %v522 = vshrl.u32 %v521, 7
    %v523 = vsub.s32 0, %v522
    %v524 = vrot.slane %v515, %v523
    %v526 = vmul.f32 %v517, %v524
    %v527 = vmul.f32 %v519, %v524
    %v528 = vadd.f32 %v507, %v526
    %v529 = vadd.f32 %v508, %v527
    %s530 = sld [smem:[#allocation6 + $0x14]]
    %s531 = sld [smem:[#allocation6 + $0x2d]]
    %v532 = vstv %s530
    %v533 = vmul.f32 %v60, %v532
    %v534 = vstv %s531
    %v535 = vmul.f32 %v61, %v534
    %v536 = vadd.f32 %v533, %v535
    %vm537 = vcmask 1043456
    %v538 = vrot.slane %v63, 4
    %v539 = vrot.slane %v64, 4
    %v540 = vsel %vm537, %v538, %v539
    %v541 = vrot.slane %v65, 4
    %v542 = vsel %vm537, %v539, %v541
    %545 = vrot.lane.b32.xlu0 %v540, 2
    %v546 = vpop.permute.xlu0 %545
    %547 = vrot.lane.b32.xlu0 %v542, 2
    %v548 = vpop.permute.xlu0 %547
    %v550 = vlaneseq
    %v551 = vshrl.u32 %v550, 7
    %v552 = vsub.s32 0, %v551
    %v553 = vrot.slane %v536, %v552
    %v555 = vmul.f32 %v546, %v553
    %v556 = vmul.f32 %v548, %v553
    %v557 = vadd.f32 %v528, %v555
    %v558 = vadd.f32 %v529, %v556
    %s559 = sld [smem:[#allocation6 + $0x15]]
    %s560 = sld [smem:[#allocation6 + $0x2e]]
    %v561 = vstv %s559
    %v562 = vmul.f32 %v60, %v561
    %v563 = vstv %s560
    %v564 = vmul.f32 %v61, %v563
    %v565 = vadd.f32 %v562, %v564
    %566 = vrot.lane.b32.xlu0 %v540, 1
    %v567 = vpop.permute.xlu0 %566
    %568 = vrot.lane.b32.xlu0 %v542, 1
    %v569 = vpop.permute.xlu0 %568
    %v571 = vlaneseq
    %v572 = vshrl.u32 %v571, 7
    %v573 = vsub.s32 0, %v572
    %v574 = vrot.slane %v565, %v573
    %v576 = vmul.f32 %v567, %v574
    %v577 = vmul.f32 %v569, %v574
    %v578 = vadd.f32 %v557, %v576
    %v579 = vadd.f32 %v558, %v577
    %s580 = sld [smem:[#allocation6 + $0x16]]
    %s581 = sld [smem:[#allocation6 + $0x2f]]
    %v582 = vstv %s580
    %v583 = vmul.f32 %v60, %v582
    %v584 = vstv %s581
    %v585 = vmul.f32 %v61, %v584
    %v586 = vadd.f32 %v583, %v585
    %v588 = vlaneseq
    %v589 = vshrl.u32 %v588, 7
    %v590 = vsub.s32 0, %v589
    %v591 = vrot.slane %v586, %v590
    %v593 = vmul.f32 %v63, %v591
    %v594 = vmul.f32 %v64, %v591
    %v595 = vmul.f32 %v65, %v591
    %v599 = vrot.slane %v593, 4
    %v600 = vrot.slane %v594, 4
    %v601 = vsel %vm537, %v599, %v600
    %v602 = vrot.slane %v595, 4
    %v603 = vsel %vm537, %v600, %v602
    %v606 = vadd.f32 %v578, %v601
    %v607 = vadd.f32 %v579, %v603
    %s608 = sld [smem:[#allocation6 + $0x17]]
    %s609 = sld [smem:[#allocation6 + $0x30]]
    %v610 = vstv %s608
    %v611 = vmul.f32 %v60, %v610
    %v612 = vstv %s609
    %v613 = vmul.f32 %v61, %v612
    %v614 = vadd.f32 %v611, %v613
    %615 = vrot.lane.b32.xlu0 %v540, 127
    %v616 = vpop.permute.xlu0 %615
    %617 = vrot.lane.b32.xlu0 %v542, 127
    %v618 = vpop.permute.xlu0 %617
    %v620 = vlaneseq
    %v621 = vshrl.u32 %v620, 7
    %v622 = vsub.s32 0, %v621
    %v623 = vrot.slane %v614, %v622
    %v625 = vmul.f32 %v616, %v623
    %v626 = vmul.f32 %v618, %v623
    %v627 = vadd.f32 %v606, %v625
    %v628 = vadd.f32 %v607, %v626
    %s629 = sld [smem:[#allocation6 + $0x18]]
    %s630 = sld [smem:[#allocation6 + $0x31]]
    %v631 = vstv %s629
    %v632 = vmul.f32 %v60, %v631
    %v633 = vstv %s630
    %v634 = vmul.f32 %v61, %v633
    %v635 = vadd.f32 %v632, %v634
    %636 = vrot.lane.b32.xlu0 %v540, 126
    %v637 = vpop.permute.xlu0 %636
    %638 = vrot.lane.b32.xlu0 %v542, 126
    %v639 = vpop.permute.xlu0 %638
    %v641 = vlaneseq
    %v642 = vshrl.u32 %v641, 7
    %v643 = vsub.s32 0, %v642
    %v644 = vrot.slane %v635, %v643
    %v646 = vmul.f32 %v637, %v644
    %v647 = vmul.f32 %v639, %v644
    %v648 = vadd.f32 %v627, %v646
    %v649 = vadd.f32 %v628, %v647
    %s650 = sld [smem:[#allocation7]]
    %v651 = vstv %s650
    %v652 = vmul.f32 %v60, %v651
    %s653 = sld [smem:[#allocation7 + $0x1]]
    %v654 = vstv %s653
    %v655 = vmul.f32 %v61, %v654
    %v656 = vadd.f32 %v652, %v655
    %v658 = vlaneseq
    %v659 = vshrl.u32 %v658, 7
    %v660 = vsub.s32 0, %v659
    %v661 = vrot.slane %v656, %v660
    %v663 = vadd.f32 %v648, %v661
    %v664 = vadd.f32 %v649, %v661
    %v666 = vlaneseq
    %v667 = vshrl.u32 %v666, 7
    %v668 = vsub.s32 0, %v667
    %v669 = vrot.slane %v62, %v668
    %v671 = vmul.f32 %v663, %v669
    %v672 = vmul.f32 %v664, %v669
    %vm675 = vcmask 1041408
    %v676 = vrot.slane %v671, 6
    %v677 = vrot.slane %v672, 6
    %v678 = vsel %vm675, %v676, %v677
    %v682 = vsel %vm675, 0.0, %v676
    %v683 = vsel %vm675, %v677, 0.0
    %s684 = sld [smem:[#allocation6 + $0x32]]
    %s685 = sld [smem:[#allocation6 + $0x4b]]
    %v686 = vstv %s684
    %v687 = vmul.f32 %v60, %v686
    %v688 = vstv %s685
    %v689 = vmul.f32 %v61, %v688
    %v690 = vadd.f32 %v687, %v689
    %691 = vrot.lane.b32.xlu0 %v682, 2
    %v692 = vpop.permute.xlu0 %691
    %693 = vrot.lane.b32.xlu0 %v678, 2
    %v694 = vpop.permute.xlu0 %693
    %v696 = vlaneseq
    %v697 = vshrl.u32 %v696, 7
    %v698 = vsub.s32 0, %v697
    %v699 = vrot.slane %v690, %v698
    %v701 = vmul.f32 %v692, %v699
    %v702 = vmul.f32 %v694, %v699
    %v703 = vadd.f32 %v701, 0.0
    %v704 = vadd.f32 %v702, 0.0
    %s705 = sld [smem:[#allocation6 + $0x33]]
    %s706 = sld [smem:[#allocation6 + $0x4c]]
    %v707 = vstv %s705
    %v708 = vmul.f32 %v60, %v707
    %v709 = vstv %s706
    %v710 = vmul.f32 %v61, %v709
    %v711 = vadd.f32 %v708, %v710
    %712 = vrot.lane.b32.xlu0 %v682, 1
    %v713 = vpop.permute.xlu0 %712
    %714 = vrot.lane.b32.xlu0 %v678, 1
    %v715 = vpop.permute.xlu0 %714
    %v717 = vlaneseq
    %v718 = vshrl.u32 %v717, 7
    %v719 = vsub.s32 0, %v718
    %v720 = vrot.slane %v711, %v719
    %v722 = vmul.f32 %v713, %v720
    %v723 = vmul.f32 %v715, %v720
    %v724 = vadd.f32 %v703, %v722
    %v725 = vadd.f32 %v704, %v723
    %s726 = sld [smem:[#allocation6 + $0x34]]
    %s727 = sld [smem:[#allocation6 + $0x4d]]
    %v728 = vstv %s726
    %v729 = vmul.f32 %v60, %v728
    %v730 = vstv %s727
    %v731 = vmul.f32 %v61, %v730
    %v732 = vadd.f32 %v729, %v731
    %v734 = vlaneseq
    %v735 = vshrl.u32 %v734, 7
    %v736 = vsub.s32 0, %v735
    %v737 = vrot.slane %v732, %v736
    %v739 = vmul.f32 %v682, %v737
    %v740 = vmul.f32 %v678, %v737
    %v741 = vadd.f32 %v724, %v739
    %v742 = vadd.f32 %v725, %v740
    %s743 = sld [smem:[#allocation6 + $0x35]]
    %s744 = sld [smem:[#allocation6 + $0x4e]]
    %v745 = vstv %s743
    %v746 = vmul.f32 %v60, %v745
    %v747 = vstv %s744
    %v748 = vmul.f32 %v61, %v747
    %v749 = vadd.f32 %v746, %v748
    %750 = vrot.lane.b32.xlu0 %v682, 127
    %v751 = vpop.permute.xlu0 %750
    %752 = vrot.lane.b32.xlu0 %v678, 127
    %v753 = vpop.permute.xlu0 %752
    %v755 = vlaneseq
    %v756 = vshrl.u32 %v755, 7
    %v757 = vsub.s32 0, %v756
    %v758 = vrot.slane %v749, %v757
    %v760 = vmul.f32 %v751, %v758
    %v761 = vmul.f32 %v753, %v758
    %v762 = vadd.f32 %v741, %v760
    %v763 = vadd.f32 %v742, %v761
    %s764 = sld [smem:[#allocation6 + $0x36]]
    %s765 = sld [smem:[#allocation6 + $0x4f]]
    %v766 = vstv %s764
    %v767 = vmul.f32 %v60, %v766
    %v768 = vstv %s765
    %v769 = vmul.f32 %v61, %v768
    %v770 = vadd.f32 %v767, %v769
    %771 = vrot.lane.b32.xlu0 %v682, 126
    %v772 = vpop.permute.xlu0 %771
    %773 = vrot.lane.b32.xlu0 %v678, 126
    %v774 = vpop.permute.xlu0 %773
    %v776 = vlaneseq
    %v777 = vshrl.u32 %v776, 7
    %v778 = vsub.s32 0, %v777
    %v779 = vrot.slane %v770, %v778
    %v781 = vmul.f32 %v772, %v779
    %v782 = vmul.f32 %v774, %v779
    %v783 = vadd.f32 %v762, %v781
    %v784 = vadd.f32 %v763, %v782
    %s785 = sld [smem:[#allocation6 + $0x37]]
    %s786 = sld [smem:[#allocation6 + $0x50]]
    %v787 = vstv %s785
    %v788 = vmul.f32 %v60, %v787
    %v789 = vstv %s786
    %v790 = vmul.f32 %v61, %v789
    %v791 = vadd.f32 %v788, %v790
    %v794 = vrot.slane %v682, 1
    %v795 = vrot.slane %v678, 1
    %v796 = vsel %vm177, %v794, %v795
    %v797 = vrot.slane %v683, 1
    %v798 = vsel %vm177, %v795, %v797
    %801 = vrot.lane.b32.xlu0 %v796, 2
    %v802 = vpop.permute.xlu0 %801
    %803 = vrot.lane.b32.xlu0 %v798, 2
    %v804 = vpop.permute.xlu0 %803
    %v806 = vlaneseq
    %v807 = vshrl.u32 %v806, 7
    %v808 = vsub.s32 0, %v807
    %v809 = vrot.slane %v791, %v808
    %v811 = vmul.f32 %v802, %v809
    %v812 = vmul.f32 %v804, %v809
    %v813 = vadd.f32 %v783, %v811
    %v814 = vadd.f32 %v784, %v812
    %s815 = sld [smem:[#allocation6 + $0x38]]
    %s816 = sld [smem:[#allocation6 + $0x51]]
    %v817 = vstv %s815
    %v818 = vmul.f32 %v60, %v817
    %v819 = vstv %s816
    %v820 = vmul.f32 %v61, %v819
    %v821 = vadd.f32 %v818, %v820
    %822 = vrot.lane.b32.xlu0 %v796, 1
    %v823 = vpop.permute.xlu0 %822
    %824 = vrot.lane.b32.xlu0 %v798, 1
    %v825 = vpop.permute.xlu0 %824
    %v827 = vlaneseq
    %v828 = vshrl.u32 %v827, 7
    %v829 = vsub.s32 0, %v828
    %v830 = vrot.slane %v821, %v829
    %v832 = vmul.f32 %v823, %v830
    %v833 = vmul.f32 %v825, %v830
    %v834 = vadd.f32 %v813, %v832
    %v835 = vadd.f32 %v814, %v833
    %s836 = sld [smem:[#allocation6 + $0x39]]
    %s837 = sld [smem:[#allocation6 + $0x52]]
    %v838 = vstv %s836
    %v839 = vmul.f32 %v60, %v838
    %v840 = vstv %s837
    %v841 = vmul.f32 %v61, %v840
    %v842 = vadd.f32 %v839, %v841
    %v844 = vlaneseq
    %v845 = vshrl.u32 %v844, 7
    %v846 = vsub.s32 0, %v845
    %v847 = vrot.slane %v842, %v846
    %v849 = vmul.f32 %v682, %v847
    %v850 = vmul.f32 %v678, %v847
    %v851 = vmul.f32 %v683, %v847
    %v855 = vrot.slane %v849, 1
    %v856 = vrot.slane %v850, 1
    %v857 = vsel %vm177, %v855, %v856
    %v858 = vrot.slane %v851, 1
    %v859 = vsel %vm177, %v856, %v858
    %v862 = vadd.f32 %v834, %v857
    %v863 = vadd.f32 %v835, %v859
    %s864 = sld [smem:[#allocation6 + $0x3a]]
    %s865 = sld [smem:[#allocation6 + $0x53]]
    %v866 = vstv %s864
    %v867 = vmul.f32 %v60, %v866
    %v868 = vstv %s865
    %v869 = vmul.f32 %v61, %v868
    %v870 = vadd.f32 %v867, %v869
    %871 = vrot.lane.b32.xlu0 %v796, 127
    %v872 = vpop.permute.xlu0 %871
    %873 = vrot.lane.b32.xlu0 %v798, 127
    %v874 = vpop.permute.xlu0 %873
    %v876 = vlaneseq
    %v877 = vshrl.u32 %v876, 7
    %v878 = vsub.s32 0, %v877
    %v879 = vrot.slane %v870, %v878
    %v881 = vmul.f32 %v872, %v879
    %v882 = vmul.f32 %v874, %v879
    %v883 = vadd.f32 %v862, %v881
    %v884 = vadd.f32 %v863, %v882
    %s885 = sld [smem:[#allocation6 + $0x3b]]
    %s886 = sld [smem:[#allocation6 + $0x54]]
    %v887 = vstv %s885
    %v888 = vmul.f32 %v60, %v887
    %v889 = vstv %s886
    %v890 = vmul.f32 %v61, %v889
    %v891 = vadd.f32 %v888, %v890
    %892 = vrot.lane.b32.xlu0 %v796, 126
    %v893 = vpop.permute.xlu0 %892
    %894 = vrot.lane.b32.xlu0 %v798, 126
    %v895 = vpop.permute.xlu0 %894
    %v897 = vlaneseq
    %v898 = vshrl.u32 %v897, 7
    %v899 = vsub.s32 0, %v898
    %v900 = vrot.slane %v891, %v899
    %v902 = vmul.f32 %v893, %v900
    %v903 = vmul.f32 %v895, %v900
    %v904 = vadd.f32 %v883, %v902
    %v905 = vadd.f32 %v884, %v903
    %s906 = sld [smem:[#allocation6 + $0x3c]]
    %s907 = sld [smem:[#allocation6 + $0x55]]
    %v908 = vstv %s906
    %v909 = vmul.f32 %v60, %v908
    %v910 = vstv %s907
    %v911 = vmul.f32 %v61, %v910
    %v912 = vadd.f32 %v909, %v911
    %v913 = vrot.slane %v682, 2
    %v914 = vrot.slane %v678, 2
    %v915 = vsel %vm297, %v913, %v914
    %v916 = vrot.slane %v683, 2
    %v917 = vsel %vm297, %v914, %v916
    %920 = vrot.lane.b32.xlu0 %v915, 2
    %v921 = vpop.permute.xlu0 %920
    %922 = vrot.lane.b32.xlu0 %v917, 2
    %v923 = vpop.permute.xlu0 %922
    %v925 = vlaneseq
    %v926 = vshrl.u32 %v925, 7
    %v927 = vsub.s32 0, %v926
    %v928 = vrot.slane %v912, %v927
    %v930 = vmul.f32 %v921, %v928
    %v931 = vmul.f32 %v923, %v928
    %v932 = vadd.f32 %v904, %v930
    %v933 = vadd.f32 %v905, %v931
    %s934 = sld [smem:[#allocation6 + $0x3d]]
    %s935 = sld [smem:[#allocation6 + $0x56]]
    %v936 = vstv %s934
    %v937 = vmul.f32 %v60, %v936
    %v938 = vstv %s935
    %v939 = vmul.f32 %v61, %v938
    %v940 = vadd.f32 %v937, %v939
    %941 = vrot.lane.b32.xlu0 %v915, 1
    %v942 = vpop.permute.xlu0 %941
    %943 = vrot.lane.b32.xlu0 %v917, 1
    %v944 = vpop.permute.xlu0 %943
    %v946 = vlaneseq
    %v947 = vshrl.u32 %v946, 7
    %v948 = vsub.s32 0, %v947
    %v949 = vrot.slane %v940, %v948
    %v951 = vmul.f32 %v942, %v949
    %v952 = vmul.f32 %v944, %v949
    %v953 = vadd.f32 %v932, %v951
    %v954 = vadd.f32 %v933, %v952
    %s955 = sld [smem:[#allocation6 + $0x3e]]
    %s956 = sld [smem:[#allocation6 + $0x57]]
    %v957 = vstv %s955
    %v958 = vmul.f32 %v60, %v957
    %v959 = vstv %s956
    %v960 = vmul.f32 %v61, %v959
    %v961 = vadd.f32 %v958, %v960
    %v963 = vlaneseq
    %v964 = vshrl.u32 %v963, 7
    %v965 = vsub.s32 0, %v964
    %v966 = vrot.slane %v961, %v965
    %v968 = vmul.f32 %v682, %v966
    %v969 = vmul.f32 %v678, %v966
    %v970 = vmul.f32 %v683, %v966
    %v974 = vrot.slane %v968, 2
    %v975 = vrot.slane %v969, 2
    %v976 = vsel %vm297, %v974, %v975
    %v977 = vrot.slane %v970, 2
    %v978 = vsel %vm297, %v975, %v977
    %v981 = vadd.f32 %v953, %v976
    %v982 = vadd.f32 %v954, %v978
    %s983 = sld [smem:[#allocation6 + $0x3f]]
    %s984 = sld [smem:[#allocation6 + $0x58]]
    %v985 = vstv %s983
    %v986 = vmul.f32 %v60, %v985
    %v987 = vstv %s984
    %v988 = vmul.f32 %v61, %v987
    %v989 = vadd.f32 %v986, %v988
    %990 = vrot.lane.b32.xlu0 %v915, 127
    %v991 = vpop.permute.xlu0 %990
    %992 = vrot.lane.b32.xlu0 %v917, 127
    %v993 = vpop.permute.xlu0 %992
    %v995 = vlaneseq
    %v996 = vshrl.u32 %v995, 7
    %v997 = vsub.s32 0, %v996
    %v998 = vrot.slane %v989, %v997
    %v1000 = vmul.f32 %v991, %v998
    %v1001 = vmul.f32 %v993, %v998
    %v1002 = vadd.f32 %v981, %v1000
    %v1003 = vadd.f32 %v982, %v1001
    %s1004 = sld [smem:[#allocation6 + $0x40]]
    %s1005 = sld [smem:[#allocation6 + $0x59]]
    %v1006 = vstv %s1004
    %v1007 = vmul.f32 %v60, %v1006
    %v1008 = vstv %s1005
    %v1009 = vmul.f32 %v61, %v1008
    %v1010 = vadd.f32 %v1007, %v1009
    %1011 = vrot.lane.b32.xlu0 %v915, 126
    %v1012 = vpop.permute.xlu0 %1011
    %1013 = vrot.lane.b32.xlu0 %v917, 126
    %v1014 = vpop.permute.xlu0 %1013
    %v1016 = vlaneseq
    %v1017 = vshrl.u32 %v1016, 7
    %v1018 = vsub.s32 0, %v1017
    %v1019 = vrot.slane %v1010, %v1018
    %v1021 = vmul.f32 %v1012, %v1019
    %v1022 = vmul.f32 %v1014, %v1019
    %v1023 = vadd.f32 %v1002, %v1021
    %v1024 = vadd.f32 %v1003, %v1022
    %s1025 = sld [smem:[#allocation6 + $0x41]]
    %s1026 = sld [smem:[#allocation6 + $0x5a]]
    %v1027 = vstv %s1025
    %v1028 = vmul.f32 %v60, %v1027
    %v1029 = vstv %s1026
    %v1030 = vmul.f32 %v61, %v1029
    %v1031 = vadd.f32 %v1028, %v1030
    %v1032 = vrot.slane %v682, 3
    %v1033 = vrot.slane %v678, 3
    %v1034 = vsel %vm417, %v1032, %v1033
    %v1035 = vrot.slane %v683, 3
    %v1036 = vsel %vm417, %v1033, %v1035
    %1039 = vrot.lane.b32.xlu0 %v1034, 2
    %v1040 = vpop.permute.xlu0 %1039
    %1041 = vrot.lane.b32.xlu0 %v1036, 2
    %v1042 = vpop.permute.xlu0 %1041
    %v1044 = vlaneseq
    %v1045 = vshrl.u32 %v1044, 7
    %v1046 = vsub.s32 0, %v1045
    %v1047 = vrot.slane %v1031, %v1046
    %v1049 = vmul.f32 %v1040, %v1047
    %v1050 = vmul.f32 %v1042, %v1047
    %v1051 = vadd.f32 %v1023, %v1049
    %v1052 = vadd.f32 %v1024, %v1050
    %s1053 = sld [smem:[#allocation6 + $0x42]]
    %s1054 = sld [smem:[#allocation6 + $0x5b]]
    %v1055 = vstv %s1053
    %v1056 = vmul.f32 %v60, %v1055
    %v1057 = vstv %s1054
    %v1058 = vmul.f32 %v61, %v1057
    %v1059 = vadd.f32 %v1056, %v1058
    %1060 = vrot.lane.b32.xlu0 %v1034, 1
    %v1061 = vpop.permute.xlu0 %1060
    %1062 = vrot.lane.b32.xlu0 %v1036, 1
    %v1063 = vpop.permute.xlu0 %1062
    %v1065 = vlaneseq
    %v1066 = vshrl.u32 %v1065, 7
    %v1067 = vsub.s32 0, %v1066
    %v1068 = vrot.slane %v1059, %v1067
    %v1070 = vmul.f32 %v1061, %v1068
    %v1071 = vmul.f32 %v1063, %v1068
    %v1072 = vadd.f32 %v1051, %v1070
    %v1073 = vadd.f32 %v1052, %v1071
    %s1074 = sld [smem:[#allocation6 + $0x43]]
    %s1075 = sld [smem:[#allocation6 + $0x5c]]
    %v1076 = vstv %s1074
    %v1077 = vmul.f32 %v60, %v1076
    %v1078 = vstv %s1075
    %v1079 = vmul.f32 %v61, %v1078
    %v1080 = vadd.f32 %v1077, %v1079
    %v1082 = vlaneseq
    %v1083 = vshrl.u32 %v1082, 7
    %v1084 = vsub.s32 0, %v1083
    %v1085 = vrot.slane %v1080, %v1084
    %v1087 = vmul.f32 %v682, %v1085
    %v1088 = vmul.f32 %v678, %v1085
    %v1089 = vmul.f32 %v683, %v1085
    %v1093 = vrot.slane %v1087, 3
    %v1094 = vrot.slane %v1088, 3
    %v1095 = vsel %vm417, %v1093, %v1094
    %v1096 = vrot.slane %v1089, 3
    %v1097 = vsel %vm417, %v1094, %v1096
    %v1100 = vadd.f32 %v1072, %v1095
    %v1101 = vadd.f32 %v1073, %v1097
    %s1102 = sld [smem:[#allocation6 + $0x44]]
    %s1103 = sld [smem:[#allocation6 + $0x5d]]
    %v1104 = vstv %s1102
    %v1105 = vmul.f32 %v60, %v1104
    %v1106 = vstv %s1103
    %v1107 = vmul.f32 %v61, %v1106
    %v1108 = vadd.f32 %v1105, %v1107
    %1109 = vrot.lane.b32.xlu0 %v1034, 127
    %v1110 = vpop.permute.xlu0 %1109
    %1111 = vrot.lane.b32.xlu0 %v1036, 127
    %v1112 = vpop.permute.xlu0 %1111
    %v1114 = vlaneseq
    %v1115 = vshrl.u32 %v1114, 7
    %v1116 = vsub.s32 0, %v1115
    %v1117 = vrot.slane %v1108, %v1116
    %v1119 = vmul.f32 %v1110, %v1117
    %v1120 = vmul.f32 %v1112, %v1117
    %v1121 = vadd.f32 %v1100, %v1119
    %v1122 = vadd.f32 %v1101, %v1120
    %s1123 = sld [smem:[#allocation6 + $0x45]]
    %s1124 = sld [smem:[#allocation6 + $0x5e]]
    %v1125 = vstv %s1123
    %v1126 = vmul.f32 %v60, %v1125
    %v1127 = vstv %s1124
    %v1128 = vmul.f32 %v61, %v1127
    %v1129 = vadd.f32 %v1126, %v1128
    %1130 = vrot.lane.b32.xlu0 %v1034, 126
    %v1131 = vpop.permute.xlu0 %1130
    %1132 = vrot.lane.b32.xlu0 %v1036, 126
    %v1133 = vpop.permute.xlu0 %1132
    %v1135 = vlaneseq
    %v1136 = vshrl.u32 %v1135, 7
    %v1137 = vsub.s32 0, %v1136
    %v1138 = vrot.slane %v1129, %v1137
    %v1140 = vmul.f32 %v1131, %v1138
    %v1141 = vmul.f32 %v1133, %v1138
    %v1142 = vadd.f32 %v1121, %v1140
    %v1143 = vadd.f32 %v1122, %v1141
    %s1144 = sld [smem:[#allocation6 + $0x46]]
    %s1145 = sld [smem:[#allocation6 + $0x5f]]
    %v1146 = vstv %s1144
    %v1147 = vmul.f32 %v60, %v1146
    %v1148 = vstv %s1145
    %v1149 = vmul.f32 %v61, %v1148
    %v1150 = vadd.f32 %v1147, %v1149
    %v1151 = vrot.slane %v682, 4
    %v1152 = vrot.slane %v678, 4
    %v1153 = vsel %vm537, %v1151, %v1152
    %v1154 = vrot.slane %v683, 4
    %v1155 = vsel %vm537, %v1152, %v1154
    %1158 = vrot.lane.b32.xlu0 %v1153, 2
    %v1159 = vpop.permute.xlu0 %1158
    %1160 = vrot.lane.b32.xlu0 %v1155, 2
    %v1161 = vpop.permute.xlu0 %1160
    %v1163 = vlaneseq
    %v1164 = vshrl.u32 %v1163, 7
    %v1165 = vsub.s32 0, %v1164
    %v1166 = vrot.slane %v1150, %v1165
    %v1168 = vmul.f32 %v1159, %v1166
    %v1169 = vmul.f32 %v1161, %v1166
    %v1170 = vadd.f32 %v1142, %v1168
    %v1171 = vadd.f32 %v1143, %v1169
    %s1172 = sld [smem:[#allocation6 + $0x47]]
    %s1173 = sld [smem:[#allocation6 + $0x60]]
    %v1174 = vstv %s1172
    %v1175 = vmul.f32 %v60, %v1174
    %v1176 = vstv %s1173
    %v1177 = vmul.f32 %v61, %v1176
    %v1178 = vadd.f32 %v1175, %v1177
    %1179 = vrot.lane.b32.xlu0 %v1153, 1
    %v1180 = vpop.permute.xlu0 %1179
    %1181 = vrot.lane.b32.xlu0 %v1155, 1
    %v1182 = vpop.permute.xlu0 %1181
    %v1184 = vlaneseq
    %v1185 = vshrl.u32 %v1184, 7
    %v1186 = vsub.s32 0, %v1185
    %v1187 = vrot.slane %v1178, %v1186
    %v1189 = vmul.f32 %v1180, %v1187
    %v1190 = vmul.f32 %v1182, %v1187
    %v1191 = vadd.f32 %v1170, %v1189
    %v1192 = vadd.f32 %v1171, %v1190
    %s1193 = sld [smem:[#allocation6 + $0x48]]
    %s1194 = sld [smem:[#allocation6 + $0x61]]
    %v1195 = vstv %s1193
    %v1196 = vmul.f32 %v60, %v1195
    %v1197 = vstv %s1194
    %v1198 = vmul.f32 %v61, %v1197
    %v1199 = vadd.f32 %v1196, %v1198
    %v1201 = vlaneseq
    %v1202 = vshrl.u32 %v1201, 7
    %v1203 = vsub.s32 0, %v1202
    %v1204 = vrot.slane %v1199, %v1203
    %v1206 = vmul.f32 %v682, %v1204
    %v1207 = vmul.f32 %v678, %v1204
    %v1208 = vmul.f32 %v683, %v1204
    %v1212 = vrot.slane %v1206, 4
    %v1213 = vrot.slane %v1207, 4
    %v1214 = vsel %vm537, %v1212, %v1213
    %v1215 = vrot.slane %v1208, 4
    %v1216 = vsel %vm537, %v1213, %v1215
    %v1219 = vadd.f32 %v1191, %v1214
    %v1220 = vadd.f32 %v1192, %v1216
    %s1221 = sld [smem:[#allocation6 + $0x49]]
    %s1222 = sld [smem:[#allocation6 + $0x62]]
    %v1223 = vstv %s1221
    %v1224 = vmul.f32 %v60, %v1223
    %v1225 = vstv %s1222
    %v1226 = vmul.f32 %v61, %v1225
    %v1227 = vadd.f32 %v1224, %v1226
    %1228 = vrot.lane.b32.xlu0 %v1153, 127
    %v1229 = vpop.permute.xlu0 %1228
    %1230 = vrot.lane.b32.xlu0 %v1155, 127
    %v1231 = vpop.permute.xlu0 %1230
    %v1233 = vlaneseq
    %v1234 = vshrl.u32 %v1233, 7
    %v1235 = vsub.s32 0, %v1234
    %v1236 = vrot.slane %v1227, %v1235
    %v1238 = vmul.f32 %v1229, %v1236
    %v1239 = vmul.f32 %v1231, %v1236
    %v1240 = vadd.f32 %v1219, %v1238
    %v1241 = vadd.f32 %v1220, %v1239
    %s1242 = sld [smem:[#allocation6 + $0x4a]]
    %s1243 = sld [smem:[#allocation6 + $0x63]]
    %v1244 = vstv %s1242
    %v1245 = vmul.f32 %v60, %v1244
    %v1246 = vstv %s1243
    %v1247 = vmul.f32 %v61, %v1246
    %v1248 = vadd.f32 %v1245, %v1247
    %1249 = vrot.lane.b32.xlu0 %v1153, 126
    %v1250 = vpop.permute.xlu0 %1249
    %1251 = vrot.lane.b32.xlu0 %v1155, 126
    %v1252 = vpop.permute.xlu0 %1251
    %v1254 = vlaneseq
    %v1255 = vshrl.u32 %v1254, 7
    %v1256 = vsub.s32 0, %v1255
    %v1257 = vrot.slane %v1248, %v1256
    %v1259 = vmul.f32 %v1250, %v1257
    %v1260 = vmul.f32 %v1252, %v1257
    %v1261 = vadd.f32 %v1240, %v1259
    %v1262 = vadd.f32 %v1241, %v1260
    %s1263 = sld [smem:[#allocation7 + $0x2]]
    %v1264 = vstv %s1263
    %v1265 = vmul.f32 %v60, %v1264
    %s1266 = sld [smem:[#allocation7 + $0x3]]
    %v1267 = vstv %s1266
    %v1268 = vmul.f32 %v61, %v1267
    %v1269 = vadd.f32 %v1265, %v1268
    %v1271 = vlaneseq
    %v1272 = vshrl.u32 %v1271, 7
    %v1273 = vsub.s32 0, %v1272
    %v1274 = vrot.slane %v1269, %v1273
    %v1276 = vadd.f32 %v1261, %v1274
    %v1277 = vadd.f32 %v1262, %v1274
    %v1278 = vmul.f32 %v1276, %v669
    %v1279 = vmul.f32 %v1277, %v669
    %1280 = vst [vmem:[#allocation9] sm:$0xff] %v1278
    %1281 = vst [vmem:[#allocation9 + $0x8] sm:$0xff] %v1279
    // Predicated region
    $region34: #{tpu_custom_call.1} parent=1 // pred_check
      _
    $region35: #{tpu_custom_call.1} parent=1 // pred_check_branch
      %1283 = sbr.rel (0) target = $region37
    $region36: #{tpu_custom_call.1} parent=1 // pred_region
      %s1285 = ssub.s32 256, 256
      %1286 = vsyncadd [#allocation4], %s1285
      %s1287 = sshll.u32 [#allocation9], 4
      %s1288 = int_to_ptr.vmem [resolvable:$true] %s1287
      %1293 = dma.vmem_to_hbm [thread:$0]  %s1288, 256, %s5, [#allocation4], 128, 128, 8
    $region37: #{tpu_custom_call.1} parent=1 // pred_fallthru
      _
    // Predicated region
    $region38: #{tpu_custom_call.1} parent=1 // pred_check
      _
    $region39: #{tpu_custom_call.1} parent=1 // pred_check_branch
      %1295 = sbr.rel (0) target = $region41
    $region40: #{tpu_custom_call.1} parent=1 // pred_region
      %1296 = dma.done [#allocation4], 256
    $region41: #{tpu_custom_call.1} parent=1 // pred_fallthru
      _
    %1297 = vsyncpa [#allocation3], 1
    %1298 = vsyncpa [#allocation4], 1
    %1299 = vsyncpa [#allocation5], 1
    %1300 = vsyncpa [#allocation8], 1

</llo_original>
